<compile_context>
chip_gen: v6e
topology: v6e:2x2x1
jax: 0.10.0
libtpu: 0.0.40
codegen_flags: <defaults>
</compile_context>

<pallas_src>
import jax
import jax.numpy as jnp
from jax.experimental import pallas as pl
from jax.experimental.pallas import tpu as pltpu

NEG_MASK = -1e30          # additive mask bias for non-edges (f32)
IN_CH = 3
OUT_CH = 6
HIDDEN = 128
HEADS2 = 4                # heads of the second GATConv


# ---------------------------------------------------------------------------
# In-kernel helper (traced inline): one GAT head, dense masked softmax
# ---------------------------------------------------------------------------
def _gat_head(x, w, a, b, mask_bias):
    """Single GAT head.

    x:         [N, Fin]  f32 node features
    w:         [Fin, Fout] head projection
    a:         [Fin, 2]  folded attention vectors (col0 = W@a_src, col1 = W@a_dst)
    b:         [1, Fout] bias
    mask_bias: [N, N] f32, 0.0 where edge j->i (incl. self loop), -1e30 otherwise
    returns    [N, Fout] f32 (pre-activation)
    """
    xh = jnp.dot(x, w, preferred_element_type=jnp.float32)            # [N, Fout]

    coef = jnp.dot(x, a, preferred_element_type=jnp.float32)          # [N, 2]
    coef_t = jnp.transpose(coef)                                      # [2, N]
    a_src = coef_t[0:1, :]                                            # [1, N]
    a_dst = coef[:, 1:2]                                              # [N, 1]

    logits = a_dst + a_src                                            # [N, N]
    logits = jnp.maximum(logits, 0.2 * logits)                        # leaky_relu(0.2)
    logits = logits + mask_bias                                       # additive mask (after leaky)
    logits = logits - jnp.max(logits, axis=-1, keepdims=True)
    e = jnp.exp(logits)                       # in [0,1]; masked entries exactly 0
    rowsum = jnp.sum(e, axis=-1, keepdims=True)                       # >= 1 (self loop)

    # Aggregate with the UNNORMALIZED e (bf16 LHS, f32 accumulation), then
    # normalize the small [N, Fout] result with an approx reciprocal (EUP).
    agg = jnp.dot(e.astype(jnp.bfloat16), xh.astype(jnp.bfloat16),
                  preferred_element_type=jnp.float32)                 # [N, Fout]
    return agg * pl.reciprocal(rowsum, approx=True) + b


# ---------------------------------------------------------------------------
# Fused kernel: grid over GAT2 heads.
#   step 0        : GAT1 (+ReLU) -> h1 scratch, zero fc accumulator
#   every step h  : GAT2 head h (+ReLU) -> acc += h2_h @ Wfc_h
#   last step     : +bfc, ReLU, BatchNorm, folded (linear2∘out), sigmoid
# ---------------------------------------------------------------------------
def _gcn_fused_kernel(x_ref, maskb_ref,
                      w1_ref, a1_ref, b1_ref,
                      w2_ref, a2_ref, b2_ref,
                      wfc_ref, bfc_ref, gamma_ref, beta_ref,
                      wo_ref, bo_ref,
                      out_ref,
                      h1_scr, acc_scr):
    h = pl.program_id(0)
    mask_bias = maskb_ref[...]                                        # [N, N] f32

    @pl.when(h == 0)
    def _():
        g1 = _gat_head(x_ref[...], w1_ref[...], a1_ref[...], b1_ref[...], mask_bias)
        h1_scr[...] = jnp.maximum(g1, 0.0)                            # fused ReLU
        acc_scr[...] = jnp.zeros_like(acc_scr)

    # GAT2, current head only (one [N,N] softmax live at a time).
    h2 = _gat_head(h1_scr[...], w2_ref[0], a2_ref[0], b2_ref[0], mask_bias)
    h2 = jnp.maximum(h2, 0.0)                                         # fused ReLU
    # fc contribution of this head: equivalent to concat(heads) @ Wfc.
    acc_scr[...] += jnp.dot(h2, wfc_ref[0], preferred_element_type=jnp.float32)

    @pl.when(h == pl.num_programs(0) - 1)
    def _():
        hf = jnp.maximum(acc_scr[...] + bfc_ref[...], 0.0)            # fc bias + ReLU
        # BatchNorm1d, training mode: batch stats, biased variance, eps=1e-5.
        mean = jnp.mean(hf, axis=0, keepdims=True)
        var = jnp.mean((hf - mean) * (hf - mean), axis=0, keepdims=True)
        hb = (hf - mean) * jax.lax.rsqrt(var + 1e-5) * gamma_ref[...] + beta_ref[...]
        # Dropout(p=0) = identity; linear2 and out folded into one zero-padded
        # [128,128] matmul so the final store is a full-lane (unmasked) vst.
        y = jnp.dot(hb, wo_ref[...], preferred_element_type=jnp.float32) + bo_ref[...]
        out_ref[...] = jax.nn.sigmoid(y)                              # [N, 128]


# ---------------------------------------------------------------------------
# Wrapper: parameter folding + pallas_call
# ---------------------------------------------------------------------------
def _fold_head_params(w, att_src, att_dst, heads, f_out):
    """w: [Fin, H*Fout]; att_*: [H, Fout] -> (wh [H,Fin,Fout], a [H,Fin,2])."""
    fin = w.shape[0]
    wh = jnp.transpose(w.reshape(fin, heads, f_out), (1, 0, 2))       # [H, Fin, Fout]
    a_src = jnp.einsum('hfk,hk->hf', wh, att_src)                     # [H, Fin]
    a_dst = jnp.einsum('hfk,hk->hf', wh, att_dst)                     # [H, Fin]
    return wh, jnp.stack([a_src, a_dst], axis=-1)                     # [H, Fin, 2]


def _prepare_inputs(params):
    fp = {}
    # GATConv1 (heads=1)
    w1h, a1h = _fold_head_params(params["w1"], params["asrc1"], params["adst1"], 1, IN_CH)
    fp["w1"], fp["a1"], fp["b1"] = w1h[0], a1h[0], params["b1"]       # [3,3] [3,2] [1,3]
    # GATConv2 (heads=4)
    w2h, a2h = _fold_head_params(params["w2"], params["asrc2"], params["adst2"], HEADS2, IN_CH)
    fp["w2h"], fp["a2h"] = w2h, a2h                                   # [4,3,3] [4,3,2]
    fp["b2h"] = params["b2"].reshape(HEADS2, IN_CH)[:, None, :]       # [4,1,3]
    # fc weight, head-reshaped: concat row h*Fout+f  ->  [h, f, :]
    fp["wfc_h"] = params["wfc"].reshape(HEADS2, IN_CH, HIDDEN)        # [4,3,128]
    # linear2 ∘ out folded (no nonlinearity between), zero-padded to 128 lanes.
    wo_fused = jnp.dot(params["w2l"], params["wo"])                   # [128,6]
    bo_fused = jnp.dot(params["b2l"], params["wo"]) + params["bo"]    # [1,6]
    fp["wo_pad"] = jnp.zeros((HIDDEN, HIDDEN), jnp.float32).at[:, :OUT_CH].set(wo_fused)
    fp["bo_pad"] = jnp.zeros((1, HIDDEN), jnp.float32).at[:, :OUT_CH].set(bo_fused)
    return fp


def _pick_vmem_limit_bytes():
    """Generation-aware VMEM budget: ~56 MiB on v7x (64 MiB physical),
    ~100 MiB on v5e/v6e (128 MiB physical), 32 MiB fallback."""
    default = 32 * 1024 * 1024
    try:
        cap = int(pltpu.get_tpu_info().vmem_capacity_bytes)
    except Exception:
        return default
    return int(max(default, min(cap - 8 * 1024 * 1024, 100 * 1024 * 1024)))


def _cost_estimate(n):
    head_layers = 1 + HEADS2
    flops = (head_layers * 2 * n * n * IN_CH        # attention @ values
             + head_layers * 8 * n * n              # logits elementwise chain
             + 2 * n * (HEADS2 * IN_CH) * HIDDEN    # fc
             + 2 * n * HIDDEN * HIDDEN)             # folded final matmul
    transcendentals = head_layers * n * n + n * HIDDEN + HIDDEN
    bytes_accessed = (4 * n * n                     # mask bias
                      + 4 * n * IN_CH               # x
                      + 4 * n * HIDDEN              # output
                      + 4 * (HIDDEN * HIDDEN + 12 * HIDDEN + 8 * HIDDEN + 64))
    return pl.CostEstimate(flops=flops, transcendentals=transcendentals,
                           bytes_accessed=bytes_accessed)


def gcn_convnet_forward(x, edge_index, params):
    """x: [N, 3] float32, edge_index: [2, E] int32 (row0=src, row1=dst)."""
    n = x.shape[0]

    # Additive mask bias built with ONE scatter (self loops appended to the
    # edge list): 0 where edge j->i or i==j, -1e30 otherwise.  Kept f32.
    idx = jnp.arange(n, dtype=edge_index.dtype)
    dst = jnp.concatenate([edge_index[1], idx])
    src = jnp.concatenate([edge_index[0], idx])
    mask_bias = jnp.full((n, n), NEG_MASK, jnp.float32).at[dst, src].set(0.0)

    fp = _prepare_inputs(params)

    const2 = lambda h: (0, 0)
    head3 = lambda h: (h, 0, 0)

    grid_spec = pltpu.PrefetchScalarGridSpec(
        num_scalar_prefetch=0,
        grid=(HEADS2,),
        in_specs=[
            pl.BlockSpec((n, IN_CH), const2),            # x
            pl.BlockSpec((n, n), const2),                # mask_bias
            pl.BlockSpec((IN_CH, IN_CH), const2),        # w1
            pl.BlockSpec((IN_CH, 2), const2),            # a1
            pl.BlockSpec((1, IN_CH), const2),            # b1
            pl.BlockSpec((1, IN_CH, IN_CH), head3),      # w2h  (per-head slice)
            pl.BlockSpec((1, IN_CH, 2), head3),          # a2h  (per-head slice)
            pl.BlockSpec((1, 1, IN_CH), head3),          # b2h  (per-head slice)
            pl.BlockSpec((1, IN_CH, HIDDEN), head3),     # wfc  (per-head slice)
            pl.BlockSpec((1, HIDDEN), const2),           # bfc
            pl.BlockSpec((1, HIDDEN), const2),           # gamma
            pl.BlockSpec((1, HIDDEN), const2),           # beta
            pl.BlockSpec((HIDDEN, HIDDEN), const2),      # wo_pad (folded lin2∘out)
            pl.BlockSpec((1, HIDDEN), const2),           # bo_pad
        ],
        out_specs=pl.BlockSpec((n, HIDDEN), const2),
        scratch_shapes=[
            pltpu.VMEM((n, IN_CH), jnp.float32),         # h1 = relu(GAT1(x))
            pltpu.VMEM((n, HIDDEN), jnp.float32),        # fc accumulator
        ],
    )

    out_pad = pl.pallas_call(
        _gcn_fused_kernel,
        out_shape=jax.ShapeDtypeStruct((n, HIDDEN), jnp.float32),
        grid_spec=grid_spec,
        compiler_params=pltpu.CompilerParams(
            # Head axis carries the fc accumulation -> must be "arbitrary".
            dimension_semantics=("arbitrary",),
            vmem_limit_bytes=_pick_vmem_limit_bytes(),
        ),
        cost_estimate=_cost_estimate(n),
    )(x, mask_bias,
      fp["w1"], fp["a1"], fp["b1"],
      fp["w2h"], fp["a2h"], fp["b2h"],
      fp["wfc_h"], params["bfc"], params["gamma"], params["beta"],
      fp["wo_pad"], fp["bo_pad"])

    return out_pad[:, :OUT_CH]                                        # [N, 6]


# ---------------------------------------------------------------------------
# Deterministic parameter init (synthetic, matches shapes from __init__)
# ---------------------------------------------------------------------------
def init_params(key, in_ch=IN_CH, out_ch=OUT_CH):
    ks = jax.random.split(key, 12)

    def lin_w(k, fin, fout):
        s = 1.0 / (fin ** 0.5)
        return jax.random.uniform(k, (fin, fout), jnp.float32, -s, s)

    def lin_b(k, fin, fout):
        s = 1.0 / (fin ** 0.5)
        return jax.random.uniform(k, (1, fout), jnp.float32, -s, s)

    return {
        # GATConv(in_ch, in_ch, heads=1)
        "w1": lin_w(ks[0], in_ch, 1 * in_ch),
        "asrc1": 0.5 * jax.random.normal(ks[1], (1, in_ch), jnp.float32),
        "adst1": 0.5 * jax.random.normal(ks[2], (1, in_ch), jnp.float32),
        "b1": jnp.zeros((1, 1 * in_ch), jnp.float32),
        # GATConv(in_ch, in_ch, heads=4)
        "w2": lin_w(ks[3], in_ch, HEADS2 * in_ch),
        "asrc2": 0.5 * jax.random.normal(ks[4], (HEADS2, in_ch), jnp.float32),
        "adst2": 0.5 * jax.random.normal(ks[5], (HEADS2, in_ch), jnp.float32),
        "b2": jnp.zeros((1, HEADS2 * in_ch), jnp.float32),
        # fc: Linear(in_ch*4, 128), BatchNorm1d(128)
        "wfc": lin_w(ks[6], HEADS2 * in_ch, HIDDEN),
        "bfc": lin_b(ks[7], HEADS2 * in_ch, HIDDEN),
        "gamma": jnp.ones((1, HIDDEN), jnp.float32),
        "beta": jnp.zeros((1, HIDDEN), jnp.float32),
        # linear2: Linear(128, 64), out: Linear(64, out_ch)
        "w2l": lin_w(ks[8], HIDDEN, 64),
        "b2l": lin_b(ks[9], HIDDEN, 64),
        "wo": lin_w(ks[10], 64, out_ch),
        "bo": lin_b(ks[11], 64, out_ch),
        # NOTE: self.linear1 (128->128) is never used in forward(), so it is omitted.
    }


# ---------------------------------------------------------------------------
if __name__ == "__main__":
    N, E = 16, 48
    key = jax.random.PRNGKey(0)
    kx, ks, kd, kp = jax.random.split(key, 4)

    x = jax.random.normal(kx, (N, IN_CH), jnp.float32)
    src = jax.random.randint(ks, (E,), 0, N, dtype=jnp.int32)
    dst = jax.random.randint(kd, (E,), 0, N, dtype=jnp.int32)
    edge_index = jnp.stack([src, dst], axis=0)                        # [2, E]

    params = init_params(kp)

    out = gcn_convnet_forward(x, edge_index, params)
    out = jax.block_until_ready(out)

    assert out.shape == (N, OUT_CH), out.shape
    assert bool(jnp.all(jnp.isfinite(out)))
    assert bool(jnp.all((out >= 0.0) & (out <= 1.0)))                 # sigmoid range
    print("KERNEL_OK")
</pallas_src>

<mosaic_0001>
module attributes {stable_mosaic.version = 11 : i64} {
  func.func @_gcn_fused_kernel(%arg0: i32, %arg1: memref<16x3xf32, #tpu.memory_space<vmem>>, %arg2: memref<16x16xf32, #tpu.memory_space<vmem>>, %arg3: memref<3x3xf32, #tpu.memory_space<vmem>>, %arg4: memref<3x2xf32, #tpu.memory_space<vmem>>, %arg5: memref<1x3xf32, #tpu.memory_space<vmem>>, %arg6: memref<1x3x3xf32, #tpu.memory_space<vmem>>, %arg7: memref<1x3x2xf32, #tpu.memory_space<vmem>>, %arg8: memref<1x1x3xf32, #tpu.memory_space<vmem>>, %arg9: memref<1x3x128xf32, #tpu.memory_space<vmem>>, %arg10: memref<1x128xf32, #tpu.memory_space<vmem>>, %arg11: memref<1x128xf32, #tpu.memory_space<vmem>>, %arg12: memref<1x128xf32, #tpu.memory_space<vmem>>, %arg13: memref<128x128xf32, #tpu.memory_space<vmem>>, %arg14: memref<1x128xf32, #tpu.memory_space<vmem>>, %arg15: memref<16x128xf32, #tpu.memory_space<vmem>>, %arg16: memref<16x3xf32, #tpu.memory_space<vmem>>, %arg17: memref<16x128xf32, #tpu.memory_space<vmem>>) attributes {dimension_semantics = [#tpu.dimension_semantics<arbitrary>], iteration_bounds = array<i64: 4>, scalar_prefetch = 0 : i64, scratch_operands = 2 : i64, tpu.core_type = #tpu.core_type<tc>, window_params = [{pipeline_mode = #tpu.pipeline_mode<synchronous>, transform_indices = @transform_0, window_bounds = array<i64: 16, 3>}, {pipeline_mode = #tpu.pipeline_mode<synchronous>, transform_indices = @transform_1, window_bounds = array<i64: 16, 16>}, {pipeline_mode = #tpu.pipeline_mode<synchronous>, transform_indices = @transform_2, window_bounds = array<i64: 3, 3>}, {pipeline_mode = #tpu.pipeline_mode<synchronous>, transform_indices = @transform_3, window_bounds = array<i64: 3, 2>}, {pipeline_mode = #tpu.pipeline_mode<synchronous>, transform_indices = @transform_4, window_bounds = array<i64: 1, 3>}, {transform_indices = @transform_5, window_bounds = array<i64: 1, 3, 3>}, {transform_indices = @transform_6, window_bounds = array<i64: 1, 3, 2>}, {transform_indices = @transform_7, window_bounds = array<i64: 1, 1, 3>}, {transform_indices = @transform_8, window_bounds = array<i64: 1, 3, 128>}, {pipeline_mode = #tpu.pipeline_mode<synchronous>, transform_indices = @transform_9, window_bounds = array<i64: 1, 128>}, {pipeline_mode = #tpu.pipeline_mode<synchronous>, transform_indices = @transform_10, window_bounds = array<i64: 1, 128>}, {pipeline_mode = #tpu.pipeline_mode<synchronous>, transform_indices = @transform_11, window_bounds = array<i64: 1, 128>}, {pipeline_mode = #tpu.pipeline_mode<synchronous>, transform_indices = @transform_12, window_bounds = array<i64: 128, 128>}, {pipeline_mode = #tpu.pipeline_mode<synchronous>, transform_indices = @transform_13, window_bounds = array<i64: 1, 128>}, {pipeline_mode = #tpu.pipeline_mode<synchronous>, transform_indices = @transform_14, window_bounds = array<i64: 16, 128>}]} {
    %c0 = arith.constant 0 : index
    %c0_0 = arith.constant 0 : index
    %0 = vector.load %arg2[%c0, %c0_0] : memref<16x16xf32, #tpu.memory_space<vmem>>, vector<16x16xf32>
    %c0_i32 = arith.constant 0 : i32
    %1 = arith.cmpi eq, %arg0, %c0_i32 : i32
    %2 = arith.extui %1 : i1 to i32
    %c0_i32_1 = arith.constant 0 : i32
    %3 = arith.cmpi ne, %2, %c0_i32_1 : i32
    scf.if %3 {
      %c0_28 = arith.constant 0 : index
      %c0_29 = arith.constant 0 : index
      %49 = vector.load %arg1[%c0_28, %c0_29] : memref<16x3xf32, #tpu.memory_space<vmem>>, vector<16x3xf32>
      %c0_30 = arith.constant 0 : index
      %c0_31 = arith.constant 0 : index
      %50 = vector.load %arg3[%c0_30, %c0_31] : memref<3x3xf32, #tpu.memory_space<vmem>>, vector<3x3xf32>
      %c0_32 = arith.constant 0 : index
      %c0_33 = arith.constant 0 : index
      %51 = vector.load %arg4[%c0_32, %c0_33] : memref<3x2xf32, #tpu.memory_space<vmem>>, vector<3x2xf32>
      %c0_34 = arith.constant 0 : index
      %c0_35 = arith.constant 0 : index
      %52 = vector.load %arg5[%c0_34, %c0_35] : memref<1x3xf32, #tpu.memory_space<vmem>>, vector<1x3xf32>
      %cst_36 = arith.constant dense<0.000000e+00> : vector<16x3xf32>
      %53 = tpu.matmul %49, %50, %cst_36 {dimension_numbers = #tpu.dot_dimension_numbers<[1], [0], [0], [1], [0, 0, 1, 1], [], []>} : vector<16x3xf32>, vector<3x3xf32>, vector<16x3xf32> -> vector<16x3xf32>
      %cst_37 = arith.constant dense<0.000000e+00> : vector<16x2xf32>
      %54 = tpu.matmul %49, %51, %cst_37 {dimension_numbers = #tpu.dot_dimension_numbers<[1], [0], [0], [1], [0, 0, 1, 1], [], []>} : vector<16x3xf32>, vector<3x2xf32>, vector<16x2xf32> -> vector<16x2xf32>
      %55 = tpu.transpose %54, [1, 0] : vector<16x2xf32> -> vector<2x16xf32>
      %56 = vector.extract_strided_slice %55 {offsets = [0, 0], sizes = [1, 16], strides = [1, 1]} : vector<2x16xf32> to vector<1x16xf32>
      %57 = vector.extract_strided_slice %54 {offsets = [0, 1], sizes = [16, 1], strides = [1, 1]} : vector<16x2xf32> to vector<16x1xf32>
      %58 = vector.broadcast %57 : vector<16x1xf32> to vector<16x16xf32>
      %59 = vector.broadcast %56 : vector<1x16xf32> to vector<16x16xf32>
      %60 = arith.addf %58, %59 : vector<16x16xf32>
      %cst_38 = arith.constant 2.000000e-01 : f32
      %61 = vector.broadcast %cst_38 : f32 to vector<16x16xf32>
      %62 = arith.mulf %61, %60 : vector<16x16xf32>
      %63 = arith.maximumf %60, %62 : vector<16x16xf32>
      %64 = arith.addf %63, %0 : vector<16x16xf32>
      %cst_39 = arith.constant dense<0xFF800000> : vector<16xf32>
      %65 = vector.multi_reduction <maximumf>, %64, %cst_39 [1] : vector<16x16xf32> to vector<16xf32>
      %66 = vector.shape_cast %65 : vector<16xf32> to vector<16x1xf32>
      %67 = vector.broadcast %66 : vector<16x1xf32> to vector<16x16xf32>
      %68 = arith.subf %64, %67 : vector<16x16xf32>
      %69 = math.exp %68 : vector<16x16xf32>
      %cst_40 = arith.constant dense<0.000000e+00> : vector<16xf32>
      %70 = vector.multi_reduction <add>, %69, %cst_40 [1] : vector<16x16xf32> to vector<16xf32>
      %71 = vector.shape_cast %70 : vector<16xf32> to vector<16x1xf32>
      %72 = arith.truncf %69 : vector<16x16xf32> to vector<16x16xbf16>
      %73 = arith.truncf %53 : vector<16x3xf32> to vector<16x3xbf16>
      %cst_41 = arith.constant dense<0.000000e+00> : vector<16x3xf32>
      %74 = tpu.matmul %72, %73, %cst_41 {dimension_numbers = #tpu.dot_dimension_numbers<[1], [0], [0], [1], [0, 0, 1, 1], [], []>} : vector<16x16xbf16>, vector<16x3xbf16>, vector<16x3xf32> -> vector<16x3xf32>
      %75 = tpu.reciprocal %71 {approx = true} : vector<16x1xf32> -> vector<16x1xf32>
      %76 = vector.broadcast %75 : vector<16x1xf32> to vector<16x3xf32>
      %77 = arith.mulf %74, %76 : vector<16x3xf32>
      %78 = vector.broadcast %52 : vector<1x3xf32> to vector<16x3xf32>
      %79 = arith.addf %77, %78 : vector<16x3xf32>
      %cst_42 = arith.constant 0.000000e+00 : f32
      %80 = vector.broadcast %cst_42 : f32 to vector<16x3xf32>
      %81 = arith.maximumf %79, %80 : vector<16x3xf32>
      %c0_43 = arith.constant 0 : index
      %c0_44 = arith.constant 0 : index
      %82 = vector.load %arg16[%c0_43, %c0_44] : memref<16x3xf32, #tpu.memory_space<vmem>>, vector<16x3xf32>
      tpu.vector_store %arg16[%c0_43, %c0_44], %81 {strides = array<i32>} : memref<16x3xf32, #tpu.memory_space<vmem>>, vector<16x3xf32>,
      %cst_45 = arith.constant 0.000000e+00 : f32
      %83 = vector.broadcast %cst_45 : f32 to vector<16x128xf32>
      %c0_46 = arith.constant 0 : index
      %c0_47 = arith.constant 0 : index
      %84 = vector.load %arg17[%c0_46, %c0_47] : memref<16x128xf32, #tpu.memory_space<vmem>>, vector<16x128xf32>
      tpu.vector_store %arg17[%c0_46, %c0_47], %83 {strides = array<i32>} : memref<16x128xf32, #tpu.memory_space<vmem>>, vector<16x128xf32>,
    } else {
    }
    %c0_2 = arith.constant 0 : index
    %c0_3 = arith.constant 0 : index
    %4 = vector.load %arg16[%c0_2, %c0_3] : memref<16x3xf32, #tpu.memory_space<vmem>>, vector<16x3xf32>
    %c0_4 = arith.constant 0 : index
    %c0_5 = arith.constant 0 : index
    %c0_6 = arith.constant 0 : index
    %5 = vector.load %arg6[%c0_4, %c0_5, %c0_6] : memref<1x3x3xf32, #tpu.memory_space<vmem>>, vector<1x3x3xf32>
    %6 = vector.shape_cast %5 : vector<1x3x3xf32> to vector<3x3xf32>
    %c0_7 = arith.constant 0 : index
    %c0_8 = arith.constant 0 : index
    %c0_9 = arith.constant 0 : index
    %7 = vector.load %arg7[%c0_7, %c0_8, %c0_9] : memref<1x3x2xf32, #tpu.memory_space<vmem>>, vector<1x3x2xf32>
    %8 = vector.shape_cast %7 : vector<1x3x2xf32> to vector<3x2xf32>
    %c0_10 = arith.constant 0 : index
    %c0_11 = arith.constant 0 : index
    %c0_12 = arith.constant 0 : index
    %9 = vector.load %arg8[%c0_10, %c0_11, %c0_12] : memref<1x1x3xf32, #tpu.memory_space<vmem>>, vector<1x1x3xf32>
    %10 = vector.shape_cast %9 : vector<1x1x3xf32> to vector<1x3xf32>
    %cst = arith.constant dense<0.000000e+00> : vector<16x3xf32>
    %11 = tpu.matmul %4, %6, %cst {dimension_numbers = #tpu.dot_dimension_numbers<[1], [0], [0], [1], [0, 0, 1, 1], [], []>} : vector<16x3xf32>, vector<3x3xf32>, vector<16x3xf32> -> vector<16x3xf32>
    %cst_13 = arith.constant dense<0.000000e+00> : vector<16x2xf32>
    %12 = tpu.matmul %4, %8, %cst_13 {dimension_numbers = #tpu.dot_dimension_numbers<[1], [0], [0], [1], [0, 0, 1, 1], [], []>} : vector<16x3xf32>, vector<3x2xf32>, vector<16x2xf32> -> vector<16x2xf32>
    %13 = tpu.transpose %12, [1, 0] : vector<16x2xf32> -> vector<2x16xf32>
    %14 = vector.extract_strided_slice %13 {offsets = [0, 0], sizes = [1, 16], strides = [1, 1]} : vector<2x16xf32> to vector<1x16xf32>
    %15 = vector.extract_strided_slice %12 {offsets = [0, 1], sizes = [16, 1], strides = [1, 1]} : vector<16x2xf32> to vector<16x1xf32>
    %16 = vector.broadcast %15 : vector<16x1xf32> to vector<16x16xf32>
    %17 = vector.broadcast %14 : vector<1x16xf32> to vector<16x16xf32>
    %18 = arith.addf %16, %17 : vector<16x16xf32>
    %cst_14 = arith.constant 2.000000e-01 : f32
    %19 = vector.broadcast %cst_14 : f32 to vector<16x16xf32>
    %20 = arith.mulf %19, %18 : vector<16x16xf32>
    %21 = arith.maximumf %18, %20 : vector<16x16xf32>
    %22 = arith.addf %21, %0 : vector<16x16xf32>
    %cst_15 = arith.constant dense<0xFF800000> : vector<16xf32>
    %23 = vector.multi_reduction <maximumf>, %22, %cst_15 [1] : vector<16x16xf32> to vector<16xf32>
    %24 = vector.shape_cast %23 : vector<16xf32> to vector<16x1xf32>
    %25 = vector.broadcast %24 : vector<16x1xf32> to vector<16x16xf32>
    %26 = arith.subf %22, %25 : vector<16x16xf32>
    %27 = math.exp %26 : vector<16x16xf32>
    %cst_16 = arith.constant dense<0.000000e+00> : vector<16xf32>
    %28 = vector.multi_reduction <add>, %27, %cst_16 [1] : vector<16x16xf32> to vector<16xf32>
    %29 = vector.shape_cast %28 : vector<16xf32> to vector<16x1xf32>
    %30 = arith.truncf %27 : vector<16x16xf32> to vector<16x16xbf16>
    %31 = arith.truncf %11 : vector<16x3xf32> to vector<16x3xbf16>
    %cst_17 = arith.constant dense<0.000000e+00> : vector<16x3xf32>
    %32 = tpu.matmul %30, %31, %cst_17 {dimension_numbers = #tpu.dot_dimension_numbers<[1], [0], [0], [1], [0, 0, 1, 1], [], []>} : vector<16x16xbf16>, vector<16x3xbf16>, vector<16x3xf32> -> vector<16x3xf32>
    %33 = tpu.reciprocal %29 {approx = true} : vector<16x1xf32> -> vector<16x1xf32>
    %34 = vector.broadcast %33 : vector<16x1xf32> to vector<16x3xf32>
    %35 = arith.mulf %32, %34 : vector<16x3xf32>
    %36 = vector.broadcast %10 : vector<1x3xf32> to vector<16x3xf32>
    %37 = arith.addf %35, %36 : vector<16x3xf32>
    %cst_18 = arith.constant 0.000000e+00 : f32
    %38 = vector.broadcast %cst_18 : f32 to vector<16x3xf32>
    %39 = arith.maximumf %37, %38 : vector<16x3xf32>
    %c0_19 = arith.constant 0 : index
    %c0_20 = arith.constant 0 : index
    %40 = vector.load %arg17[%c0_19, %c0_20] : memref<16x128xf32, #tpu.memory_space<vmem>>, vector<16x128xf32>
    %c0_21 = arith.constant 0 : index
    %c0_22 = arith.constant 0 : index
    %c0_23 = arith.constant 0 : index
    %41 = vector.load %arg9[%c0_21, %c0_22, %c0_23] : memref<1x3x128xf32, #tpu.memory_space<vmem>>, vector<1x3x128xf32>
    %42 = vector.shape_cast %41 : vector<1x3x128xf32> to vector<3x128xf32>
    %cst_24 = arith.constant dense<0.000000e+00> : vector<16x128xf32>
    %43 = tpu.matmul %39, %42, %cst_24 {dimension_numbers = #tpu.dot_dimension_numbers<[1], [0], [0], [1], [0, 0, 1, 1], [], []>} : vector<16x3xf32>, vector<3x128xf32>, vector<16x128xf32> -> vector<16x128xf32>
    %44 = arith.addf %40, %43 : vector<16x128xf32>
    %c0_25 = arith.constant 0 : index
    %c0_26 = arith.constant 0 : index
    %45 = vector.load %arg17[%c0_25, %c0_26] : memref<16x128xf32, #tpu.memory_space<vmem>>, vector<16x128xf32>
    tpu.vector_store %arg17[%c0_25, %c0_26], %44 {strides = array<i32>} : memref<16x128xf32, #tpu.memory_space<vmem>>, vector<16x128xf32>,
    %c3_i32 = arith.constant 3 : i32
    %46 = arith.cmpi eq, %arg0, %c3_i32 : i32
    %47 = arith.extui %46 : i1 to i32
    %c0_i32_27 = arith.constant 0 : i32
    %48 = arith.cmpi ne, %47, %c0_i32_27 : i32
    scf.if %48 {
      %c0_28 = arith.constant 0 : index
      %c0_29 = arith.constant 0 : index
      %49 = vector.load %arg17[%c0_28, %c0_29] : memref<16x128xf32, #tpu.memory_space<vmem>>, vector<16x128xf32>
      %c0_30 = arith.constant 0 : index
      %c0_31 = arith.constant 0 : index
      %50 = vector.load %arg10[%c0_30, %c0_31] : memref<1x128xf32, #tpu.memory_space<vmem>>, vector<1x128xf32>
      %51 = vector.broadcast %50 : vector<1x128xf32> to vector<16x128xf32>
      %52 = arith.addf %49, %51 : vector<16x128xf32>
      %cst_32 = arith.constant 0.000000e+00 : f32
      %53 = vector.broadcast %cst_32 : f32 to vector<16x128xf32>
      %54 = arith.maximumf %52, %53 : vector<16x128xf32>
      %cst_33 = arith.constant dense<0.000000e+00> : vector<128xf32>
      %55 = vector.multi_reduction <add>, %54, %cst_33 [0] : vector<16x128xf32> to vector<128xf32>
      %56 = vector.shape_cast %55 : vector<128xf32> to vector<1x128xf32>
      %cst_34 = arith.constant 1.600000e+01 : f32
      %57 = vector.broadcast %cst_34 : f32 to vector<1x128xf32>
      %58 = arith.divf %56, %57 : vector<1x128xf32>
      %59 = vector.broadcast %58 : vector<1x128xf32> to vector<16x128xf32>
      %60 = arith.subf %54, %59 : vector<16x128xf32>
      %61 = vector.broadcast %58 : vector<1x128xf32> to vector<16x128xf32>
      %62 = arith.subf %54, %61 : vector<16x128xf32>
      %63 = arith.mulf %60, %62 : vector<16x128xf32>
      %cst_35 = arith.constant dense<0.000000e+00> : vector<128xf32>
      %64 = vector.multi_reduction <add>, %63, %cst_35 [0] : vector<16x128xf32> to vector<128xf32>
      %65 = vector.shape_cast %64 : vector<128xf32> to vector<1x128xf32>
      %cst_36 = arith.constant 1.600000e+01 : f32
      %66 = vector.broadcast %cst_36 : f32 to vector<1x128xf32>
      %67 = arith.divf %65, %66 : vector<1x128xf32>
      %68 = vector.broadcast %58 : vector<1x128xf32> to vector<16x128xf32>
      %69 = arith.subf %54, %68 : vector<16x128xf32>
      %cst_37 = arith.constant 9.99999974E-6 : f32
      %70 = vector.broadcast %cst_37 : f32 to vector<1x128xf32>
      %71 = arith.addf %67, %70 : vector<1x128xf32>
      %72 = math.rsqrt %71 : vector<1x128xf32>
      %73 = vector.broadcast %72 : vector<1x128xf32> to vector<16x128xf32>
      %74 = arith.mulf %69, %73 : vector<16x128xf32>
      %c0_38 = arith.constant 0 : index
      %c0_39 = arith.constant 0 : index
      %75 = vector.load %arg11[%c0_38, %c0_39] : memref<1x128xf32, #tpu.memory_space<vmem>>, vector<1x128xf32>
      %76 = vector.broadcast %75 : vector<1x128xf32> to vector<16x128xf32>
      %77 = arith.mulf %74, %76 : vector<16x128xf32>
      %c0_40 = arith.constant 0 : index
      %c0_41 = arith.constant 0 : index
      %78 = vector.load %arg12[%c0_40, %c0_41] : memref<1x128xf32, #tpu.memory_space<vmem>>, vector<1x128xf32>
      %79 = vector.broadcast %78 : vector<1x128xf32> to vector<16x128xf32>
      %80 = arith.addf %77, %79 : vector<16x128xf32>
      %c0_42 = arith.constant 0 : index
      %c0_43 = arith.constant 0 : index
      %81 = vector.load %arg13[%c0_42, %c0_43] : memref<128x128xf32, #tpu.memory_space<vmem>>, vector<128x128xf32>
      %cst_44 = arith.constant dense<0.000000e+00> : vector<16x128xf32>
      %82 = tpu.matmul %80, %81, %cst_44 {dimension_numbers = #tpu.dot_dimension_numbers<[1], [0], [0], [1], [0, 0, 1, 1], [], []>} : vector<16x128xf32>, vector<128x128xf32>, vector<16x128xf32> -> vector<16x128xf32>
      %c0_45 = arith.constant 0 : index
      %c0_46 = arith.constant 0 : index
      %83 = vector.load %arg14[%c0_45, %c0_46] : memref<1x128xf32, #tpu.memory_space<vmem>>, vector<1x128xf32>
      %84 = vector.broadcast %83 : vector<1x128xf32> to vector<16x128xf32>
      %85 = arith.addf %82, %84 : vector<16x128xf32>
      %86 = arith.negf %85 : vector<16x128xf32>
      %87 = math.exp %86 : vector<16x128xf32>
      %cst_47 = arith.constant 1.000000e+00 : f32
      %88 = vector.broadcast %cst_47 : f32 to vector<16x128xf32>
      %89 = arith.addf %88, %87 : vector<16x128xf32>
      %90 = arith.divf %88, %89 : vector<16x128xf32>
      %c0_48 = arith.constant 0 : index
      %c0_49 = arith.constant 0 : index
      %91 = vector.load %arg15[%c0_48, %c0_49] : memref<16x128xf32, #tpu.memory_space<vmem>>, vector<16x128xf32>
      tpu.vector_store %arg15[%c0_48, %c0_49], %90 {strides = array<i32>} : memref<16x128xf32, #tpu.memory_space<vmem>>, vector<16x128xf32>,
    } else {
    }
    return
  }
  func.func @transform_0(%arg0: i32) -> (i32, i32) {
    %c0_i32 = arith.constant 0 : i32
    %c0_i32_0 = arith.constant 0 : i32
    %c0_i32_1 = arith.constant 0 : i32
    return %c0_i32, %c0_i32_0 : i32, i32
  }
  func.func @transform_1(%arg0: i32) -> (i32, i32) {
    %c0_i32 = arith.constant 0 : i32
    %c0_i32_0 = arith.constant 0 : i32
    %c0_i32_1 = arith.constant 0 : i32
    return %c0_i32, %c0_i32_0 : i32, i32
  }
  func.func @transform_2(%arg0: i32) -> (i32, i32) {
    %c0_i32 = arith.constant 0 : i32
    %c0_i32_0 = arith.constant 0 : i32
    %c0_i32_1 = arith.constant 0 : i32
    return %c0_i32, %c0_i32_0 : i32, i32
  }
  func.func @transform_3(%arg0: i32) -> (i32, i32) {
    %c0_i32 = arith.constant 0 : i32
    %c0_i32_0 = arith.constant 0 : i32
    %c0_i32_1 = arith.constant 0 : i32
    return %c0_i32, %c0_i32_0 : i32, i32
  }
  func.func @transform_4(%arg0: i32) -> (i32, i32) {
    %c0_i32 = arith.constant 0 : i32
    %c0_i32_0 = arith.constant 0 : i32
    %c0_i32_1 = arith.constant 0 : i32
    return %c0_i32, %c0_i32_0 : i32, i32
  }
  func.func @transform_5(%arg0: i32) -> (i32, i32, i32) {
    %c0_i32 = arith.constant 0 : i32
    %c0_i32_0 = arith.constant 0 : i32
    %c0_i32_1 = arith.constant 0 : i32
    return %arg0, %c0_i32, %c0_i32_0 : i32, i32, i32
  }
  func.func @transform_6(%arg0: i32) -> (i32, i32, i32) {
    %c0_i32 = arith.constant 0 : i32
    %c0_i32_0 = arith.constant 0 : i32
    %c0_i32_1 = arith.constant 0 : i32
    return %arg0, %c0_i32, %c0_i32_0 : i32, i32, i32
  }
  func.func @transform_7(%arg0: i32) -> (i32, i32, i32) {
    %c0_i32 = arith.constant 0 : i32
    %c0_i32_0 = arith.constant 0 : i32
    %c0_i32_1 = arith.constant 0 : i32
    return %arg0, %c0_i32, %c0_i32_0 : i32, i32, i32
  }
  func.func @transform_8(%arg0: i32) -> (i32, i32, i32) {
    %c0_i32 = arith.constant 0 : i32
    %c0_i32_0 = arith.constant 0 : i32
    %c0_i32_1 = arith.constant 0 : i32
    return %arg0, %c0_i32, %c0_i32_0 : i32, i32, i32
  }
  func.func @transform_9(%arg0: i32) -> (i32, i32) {
    %c0_i32 = arith.constant 0 : i32
    %c0_i32_0 = arith.constant 0 : i32
    %c0_i32_1 = arith.constant 0 : i32
    return %c0_i32, %c0_i32_0 : i32, i32
  }
  func.func @transform_10(%arg0: i32) -> (i32, i32) {
    %c0_i32 = arith.constant 0 : i32
    %c0_i32_0 = arith.constant 0 : i32
    %c0_i32_1 = arith.constant 0 : i32
    return %c0_i32, %c0_i32_0 : i32, i32
  }
  func.func @transform_11(%arg0: i32) -> (i32, i32) {
    %c0_i32 = arith.constant 0 : i32
    %c0_i32_0 = arith.constant 0 : i32
    %c0_i32_1 = arith.constant 0 : i32
    return %c0_i32, %c0_i32_0 : i32, i32
  }
  func.func @transform_12(%arg0: i32) -> (i32, i32) {
    %c0_i32 = arith.constant 0 : i32
    %c0_i32_0 = arith.constant 0 : i32
    %c0_i32_1 = arith.constant 0 : i32
    return %c0_i32, %c0_i32_0 : i32, i32
  }
  func.func @transform_13(%arg0: i32) -> (i32, i32) {
    %c0_i32 = arith.constant 0 : i32
    %c0_i32_0 = arith.constant 0 : i32
    %c0_i32_1 = arith.constant 0 : i32
    return %c0_i32, %c0_i32_0 : i32, i32
  }
  func.func @transform_14(%arg0: i32) -> (i32, i32) {
    %c0_i32 = arith.constant 0 : i32
    %c0_i32_0 = arith.constant 0 : i32
    %c0_i32_1 = arith.constant 0 : i32
    return %c0_i32, %c0_i32_0 : i32, i32
  }
}

</mosaic_0001>

<llo_original>
// kernel: tpu_custom_call.1
$region0: #{tpu_custom_call.1}
  #allocation0 [shape = 'u32[]', space=smem, size = 0x4, offset = 0x4, fixed_abs, tag = 'smem constant byte address 0x4 - core index']
  #allocation1 [shape = 'u32[144,128]{1,0:T(1,128)}', space=vmem, size = 0x12000, scoped, tag = 'internal scratch']
  #allocation2 [shape = 'f32[16,3]{1,0:T(8,128)}', space=vmem, size = 0x2000, scoped, tag = 'scratch operand']
  #allocation3 [shape = 'f32[16,128]{1,0:T(8,128)}', space=vmem, size = 0x2000, scoped, tag = 'scratch operand']
  %s0 = inlined_call_operand.vmem [shape: f32[16,3], index: 0, kind: input, shape index: {}]
  %s1 = inlined_call_operand.hbm [shape: f32[16,16], index: 1, kind: input, shape index: {}]
  %s2 = inlined_call_operand.vmem [shape: f32[3,3], index: 2, kind: input, shape index: {}]
  %s3 = inlined_call_operand.vmem [shape: f32[3,2], index: 3, kind: input, shape index: {}]
  %s4 = inlined_call_operand.hbm [shape: f32[1,3], index: 4, kind: input, shape index: {}]
  %s5 = inlined_call_operand.vmem [shape: f32[4,3,3], index: 5, kind: input, shape index: {}]
  %s6 = inlined_call_operand.vmem [shape: f32[4,3,2], index: 6, kind: input, shape index: {}]
  %s7 = inlined_call_operand.vmem [shape: f32[4,1,3], index: 7, kind: input, shape index: {}]
  %s8 = inlined_call_operand.vmem [shape: f32[4,3,128], index: 8, kind: input, shape index: {}]
  %s9 = inlined_call_operand.hbm [shape: f32[1,128], index: 9, kind: input, shape index: {}]
  %s10 = inlined_call_operand.hbm [shape: f32[1,128], index: 10, kind: input, shape index: {}]
  %s11 = inlined_call_operand.hbm [shape: f32[1,128], index: 11, kind: input, shape index: {}]
  %s12 = inlined_call_operand.vmem [shape: f32[128,128], index: 12, kind: input, shape index: {}]
  %s13 = inlined_call_operand.vmem [shape: f32[1,128], index: 13, kind: input, shape index: {}]
  %s14 = inlined_call_operand.hbm [shape: f32[16,128], index: 14, kind: output, shape index: {}]
  %s15 = sld [smem:[#allocation0]]
  $region117: #{tpu_custom_call.1} parent=0
    _
  %s17 = ssub.s32 1, %s15
  %s18 = scalar_select 0, %s17, %s15
  $region1: #{tpu_custom_call.1} parent=0
    #allocation4 [shape = 'u8[8192]{0}', space=vmem, size = 0x2000, scoped, tag = 'input window, operand 1, single buffered']
    #allocation5 [shape = 's32[2]{0}', space=sflag, size = 0x8, scoped, tag = 'scoped memory for tpu_custom_call.1']
    #allocation6 [shape = 's32[2]{0}', space=sflag, size = 0x8, scoped, tag = 'scoped memory for tpu_custom_call.1']
    #allocation7 [shape = 'u8[512]{0}', space=vmem, size = 0x400, scoped, tag = 'input window, operand 4, single buffered']
    #allocation8 [shape = 's32[1]{0}', space=sflag, size = 0x4, scoped, tag = 'scoped memory for tpu_custom_call.1']
    #allocation9 [shape = 'u8[512]{0}', space=vmem, size = 0x400, scoped, tag = 'input window, operand 9, single buffered']
    #allocation10 [shape = 'u8[512]{0}', space=vmem, size = 0x400, scoped, tag = 'input window, operand 10, single buffered']
    #allocation11 [shape = 's32[1]{0}', space=sflag, size = 0x4, scoped, tag = 'scoped memory for tpu_custom_call.1']
    #allocation12 [shape = 'u8[512]{0}', space=vmem, size = 0x400, scoped, tag = 'input window, operand 11, single buffered']
    #allocation13 [shape = 'u8[8192]{0}', space=vmem, size = 0x2000, scoped, tag = 'output window, operand 0, single buffered']
    %19 = vsyncpa [#allocation5], 0
    %20 = vsyncpa [#allocation8], 0
    %21 = vsyncpa [#allocation11], 0
    %22 = vsyncpa [#allocation6], 0
    loop: start=0, step=1, limit=6
    $region2: #{tpu_custom_call.1} parent=1 // loop_pre_header
      _
    $region3: #{tpu_custom_call.1} parent=1 // loop_header
      %s24 = sphi 0, %s28
      %p25 = scmp.ge.s32.totalorder %s24, 6
      %s32 = sphi 0, %s32
      %s34 = sphi 0, %s32
      %s35 = sphi 0, %s34
      %s49 = sphi 0, %s35
      %s53 = sphi 0, %s53
      %s55 = sphi 0, %s53
      %s56 = sphi 0, %s55
      %s70 = sphi 0, %s56
      %s74 = sphi 0, %s74
      %s76 = sphi 0, %s74
      %s77 = sphi 0, %s76
      %s91 = sphi 0, %s77
      %s95 = sphi 0, %s95
      %s97 = sphi 0, %s95
      %s98 = sphi 0, %s97
      %s112 = sphi 0, %s98
      %s116 = sphi 0, %s116
      %s118 = sphi 0, %s116
      %s119 = sphi 0, %s118
      %s133 = sphi 0, %s119
      %s139 = sphi 0, %s141
      %s142 = sphi 0, %s139
      %s143 = sphi 0, %s142
      %s159 = sphi 0, %s143
      %s165 = sphi 0, %s167
      %s168 = sphi 0, %s165
      %s169 = sphi 0, %s168
      %s185 = sphi 0, %s169
      %s191 = sphi 0, %s193
      %s194 = sphi 0, %s191
      %s195 = sphi 0, %s194
      %s211 = sphi 0, %s195
      %s217 = sphi 0, %s219
      %s220 = sphi 0, %s217
      %s221 = sphi 0, %s220
      %s237 = sphi 0, %s221
      %s241 = sphi 0, %s241
      %s243 = sphi 0, %s241
      %s244 = sphi 0, %s243
      %s258 = sphi 0, %s244
      %s262 = sphi 0, %s262
      %s264 = sphi 0, %s262
      %s265 = sphi 0, %s264
      %s279 = sphi 0, %s265
      %s283 = sphi 0, %s283
      %s285 = sphi 0, %s283
      %s286 = sphi 0, %s285
      %s300 = sphi 0, %s286
      %s304 = sphi 0, %s304
      %s306 = sphi 0, %s304
      %s307 = sphi 0, %s306
      %s321 = sphi 0, %s307
      %s325 = sphi 0, %s325
      %s327 = sphi 0, %s325
      %s328 = sphi 0, %s327
      %s342 = sphi 0, %s328
      %s346 = sphi 0, %s346
      %s348 = sphi 0, %s346
      %s349 = sphi 0, %s348
      %s363 = sphi 0, %s349
    $region4: #{tpu_custom_call.1} parent=1 // loop_header_branch
      %27 = sbr.rel (%p25) target = $region8
    $region5: #{tpu_custom_call.1} parent=1 // loop_body
      %s29 = ssub.s32 %s24, 1
      %s30 = ssub.s32 %s24, 2
      %s31 = sadd.s32 %s24, 1
      %s33 = sadd.s32 %s32, 1
      %p36 = scmp.eq.s32.totalorder %s24, 3
      %p37 = scmp.ne.s32.totalorder %s32, %s34
      %p38 = scmp.eq.s32.totalorder %s24, 0
      %p39 = por %p37, %p38
      %p40 = scmp.ne.s32.totalorder %s32, %s34
      %p41 = scmp.eq.s32.totalorder %s29, 3
      %p42 = por %p40, %p41
      %p43 = scmp.ne.s32.totalorder %s34, %s35
      %p44 = scmp.eq.s32.totalorder %s29, 0
      %p45 = por %p43, %p44
      %p46 = scmp.ne.s32.totalorder %s34, %s35
      %p47 = scmp.eq.s32.totalorder %s30, 3
      %p48 = por %p46, %p47
      %p50 = scmp.ne.s32.totalorder %s35, %s49
      %p51 = scmp.eq.s32.totalorder %s30, 0
      %p52 = por %p50, %p51
      %s54 = sadd.s32 %s53, 1
      %p57 = scmp.eq.s32.totalorder %s24, 3
      %p58 = scmp.ne.s32.totalorder %s53, %s55
      %p59 = scmp.eq.s32.totalorder %s24, 0
      %p60 = por %p58, %p59
      %p61 = scmp.ne.s32.totalorder %s53, %s55
      %p62 = scmp.eq.s32.totalorder %s29, 3
      %p63 = por %p61, %p62
      %p64 = scmp.ne.s32.totalorder %s55, %s56
      %p65 = scmp.eq.s32.totalorder %s29, 0
      %p66 = por %p64, %p65
      %p67 = scmp.ne.s32.totalorder %s55, %s56
      %p68 = scmp.eq.s32.totalorder %s30, 3
      %p69 = por %p67, %p68
      %p71 = scmp.ne.s32.totalorder %s56, %s70
      %p72 = scmp.eq.s32.totalorder %s30, 0
      %p73 = por %p71, %p72
      %s75 = sadd.s32 %s74, 1
      %p78 = scmp.eq.s32.totalorder %s24, 3
      %p79 = scmp.ne.s32.totalorder %s74, %s76
      %p80 = scmp.eq.s32.totalorder %s24, 0
      %p81 = por %p79, %p80
      %p82 = scmp.ne.s32.totalorder %s74, %s76
      %p83 = scmp.eq.s32.totalorder %s29, 3
      %p84 = por %p82, %p83
      %p85 = scmp.ne.s32.totalorder %s76, %s77
      %p86 = scmp.eq.s32.totalorder %s29, 0
      %p87 = por %p85, %p86
      %p88 = scmp.ne.s32.totalorder %s76, %s77
      %p89 = scmp.eq.s32.totalorder %s30, 3
      %p90 = por %p88, %p89
      %p92 = scmp.ne.s32.totalorder %s77, %s91
      %p93 = scmp.eq.s32.totalorder %s30, 0
      %p94 = por %p92, %p93
      %s96 = sadd.s32 %s95, 1
      %p99 = scmp.eq.s32.totalorder %s24, 3
      %p100 = scmp.ne.s32.totalorder %s95, %s97
      %p101 = scmp.eq.s32.totalorder %s24, 0
      %p102 = por %p100, %p101
      %p103 = scmp.ne.s32.totalorder %s95, %s97
      %p104 = scmp.eq.s32.totalorder %s29, 3
      %p105 = por %p103, %p104
      %p106 = scmp.ne.s32.totalorder %s97, %s98
      %p107 = scmp.eq.s32.totalorder %s29, 0
      %p108 = por %p106, %p107
      %p109 = scmp.ne.s32.totalorder %s97, %s98
      %p110 = scmp.eq.s32.totalorder %s30, 3
      %p111 = por %p109, %p110
      %p113 = scmp.ne.s32.totalorder %s98, %s112
      %p114 = scmp.eq.s32.totalorder %s30, 0
      %p115 = por %p113, %p114
      %s117 = sadd.s32 %s116, 1
      %p120 = scmp.eq.s32.totalorder %s24, 3
      %p121 = scmp.ne.s32.totalorder %s116, %s118
      %p122 = scmp.eq.s32.totalorder %s24, 0
      %p123 = por %p121, %p122
      %p124 = scmp.ne.s32.totalorder %s116, %s118
      %p125 = scmp.eq.s32.totalorder %s29, 3
      %p126 = por %p124, %p125
      %p127 = scmp.ne.s32.totalorder %s118, %s119
      %p128 = scmp.eq.s32.totalorder %s29, 0
      %p129 = por %p127, %p128
      %p130 = scmp.ne.s32.totalorder %s118, %s119
      %p131 = scmp.eq.s32.totalorder %s30, 3
      %p132 = por %p130, %p131
      %p134 = scmp.ne.s32.totalorder %s119, %s133
      %p135 = scmp.eq.s32.totalorder %s30, 0
      %p136 = por %p134, %p135
      %s137 = ssub.s32 %s24, %s31
      %p138 = scmp.eq.s32.totalorder %s137, 0
      %s140 = sadd.s32 %s139, 1
      %s141 = scalar_select %p138, %s139, %s140
      %p144 = pneg %p138
      %p145 = scmp.eq.s32.totalorder %s24, 3
      %p146 = por %p144, %p145
      %p147 = scmp.ne.s32.totalorder %s139, %s142
      %p148 = scmp.eq.s32.totalorder %s24, 0
      %p149 = por %p147, %p148
      %p150 = scmp.ne.s32.totalorder %s139, %s142
      %p151 = scmp.eq.s32.totalorder %s29, 3
      %p152 = por %p150, %p151
      %p153 = scmp.ne.s32.totalorder %s142, %s143
      %p154 = scmp.eq.s32.totalorder %s29, 0
      %p155 = por %p153, %p154
      %p156 = scmp.ne.s32.totalorder %s142, %s143
      %p157 = scmp.eq.s32.totalorder %s30, 3
      %p158 = por %p156, %p157
      %p160 = scmp.ne.s32.totalorder %s143, %s159
      %p161 = scmp.eq.s32.totalorder %s30, 0
      %p162 = por %p160, %p161
      %s163 = ssub.s32 %s24, %s31
      %p164 = scmp.eq.s32.totalorder %s163, 0
      %s166 = sadd.s32 %s165, 1
      %s167 = scalar_select %p164, %s165, %s166
      %p170 = pneg %p164
      %p171 = scmp.eq.s32.totalorder %s24, 3
      %p172 = por %p170, %p171
      %p173 = scmp.ne.s32.totalorder %s165, %s168
      %p174 = scmp.eq.s32.totalorder %s24, 0
      %p175 = por %p173, %p174
      %p176 = scmp.ne.s32.totalorder %s165, %s168
      %p177 = scmp.eq.s32.totalorder %s29, 3
      %p178 = por %p176, %p177
      %p179 = scmp.ne.s32.totalorder %s168, %s169
      %p180 = scmp.eq.s32.totalorder %s29, 0
      %p181 = por %p179, %p180
      %p182 = scmp.ne.s32.totalorder %s168, %s169
      %p183 = scmp.eq.s32.totalorder %s30, 3
      %p184 = por %p182, %p183
      %p186 = scmp.ne.s32.totalorder %s169, %s185
      %p187 = scmp.eq.s32.totalorder %s30, 0
      %p188 = por %p186, %p187
      %s189 = ssub.s32 %s24, %s31
      %p190 = scmp.eq.s32.totalorder %s189, 0
      %s192 = sadd.s32 %s191, 1
      %s193 = scalar_select %p190, %s191, %s192
      %p196 = pneg %p190
      %p197 = scmp.eq.s32.totalorder %s24, 3
      %p198 = por %p196, %p197
      %p199 = scmp.ne.s32.totalorder %s191, %s194
      %p200 = scmp.eq.s32.totalorder %s24, 0
      %p201 = por %p199, %p200
      %p202 = scmp.ne.s32.totalorder %s191, %s194
      %p203 = scmp.eq.s32.totalorder %s29, 3
      %p204 = por %p202, %p203
      %p205 = scmp.ne.s32.totalorder %s194, %s195
      %p206 = scmp.eq.s32.totalorder %s29, 0
      %p207 = por %p205, %p206
      %p208 = scmp.ne.s32.totalorder %s194, %s195
      %p209 = scmp.eq.s32.totalorder %s30, 3
      %p210 = por %p208, %p209
      %p212 = scmp.ne.s32.totalorder %s195, %s211
      %p213 = scmp.eq.s32.totalorder %s30, 0
      %p214 = por %p212, %p213
      %s215 = ssub.s32 %s24, %s31
      %p216 = scmp.eq.s32.totalorder %s215, 0
      %s218 = sadd.s32 %s217, 1
      %s219 = scalar_select %p216, %s217, %s218
      %p222 = pneg %p216
      %p223 = scmp.eq.s32.totalorder %s24, 3
      %p224 = por %p222, %p223
      %p225 = scmp.ne.s32.totalorder %s217, %s220
      %p226 = scmp.eq.s32.totalorder %s24, 0
      %p227 = por %p225, %p226
      %p228 = scmp.ne.s32.totalorder %s217, %s220
      %p229 = scmp.eq.s32.totalorder %s29, 3
      %p230 = por %p228, %p229
      %p231 = scmp.ne.s32.totalorder %s220, %s221
      %p232 = scmp.eq.s32.totalorder %s29, 0
      %p233 = por %p231, %p232
      %p234 = scmp.ne.s32.totalorder %s220, %s221
      %p235 = scmp.eq.s32.totalorder %s30, 3
      %p236 = por %p234, %p235
      %p238 = scmp.ne.s32.totalorder %s221, %s237
      %p239 = scmp.eq.s32.totalorder %s30, 0
      %p240 = por %p238, %p239
      %s242 = sadd.s32 %s241, 1
      %p245 = scmp.eq.s32.totalorder %s24, 3
      %p246 = scmp.ne.s32.totalorder %s241, %s243
      %p247 = scmp.eq.s32.totalorder %s24, 0
      %p248 = por %p246, %p247
      %p249 = scmp.ne.s32.totalorder %s241, %s243
      %p250 = scmp.eq.s32.totalorder %s29, 3
      %p251 = por %p249, %p250
      %p252 = scmp.ne.s32.totalorder %s243, %s244
      %p253 = scmp.eq.s32.totalorder %s29, 0
      %p254 = por %p252, %p253
      %p255 = scmp.ne.s32.totalorder %s243, %s244
      %p256 = scmp.eq.s32.totalorder %s30, 3
      %p257 = por %p255, %p256
      %p259 = scmp.ne.s32.totalorder %s244, %s258
      %p260 = scmp.eq.s32.totalorder %s30, 0
      %p261 = por %p259, %p260
      %s263 = sadd.s32 %s262, 1
      %p266 = scmp.eq.s32.totalorder %s24, 3
      %p267 = scmp.ne.s32.totalorder %s262, %s264
      %p268 = scmp.eq.s32.totalorder %s24, 0
      %p269 = por %p267, %p268
      %p270 = scmp.ne.s32.totalorder %s262, %s264
      %p271 = scmp.eq.s32.totalorder %s29, 3
      %p272 = por %p270, %p271
      %p273 = scmp.ne.s32.totalorder %s264, %s265
      %p274 = scmp.eq.s32.totalorder %s29, 0
      %p275 = por %p273, %p274
      %p276 = scmp.ne.s32.totalorder %s264, %s265
      %p277 = scmp.eq.s32.totalorder %s30, 3
      %p278 = por %p276, %p277
      %p280 = scmp.ne.s32.totalorder %s265, %s279
      %p281 = scmp.eq.s32.totalorder %s30, 0
      %p282 = por %p280, %p281
      %s284 = sadd.s32 %s283, 1
      %p287 = scmp.eq.s32.totalorder %s24, 3
      %p288 = scmp.ne.s32.totalorder %s283, %s285
      %p289 = scmp.eq.s32.totalorder %s24, 0
      %p290 = por %p288, %p289
      %p291 = scmp.ne.s32.totalorder %s283, %s285
      %p292 = scmp.eq.s32.totalorder %s29, 3
      %p293 = por %p291, %p292
      %p294 = scmp.ne.s32.totalorder %s285, %s286
      %p295 = scmp.eq.s32.totalorder %s29, 0
      %p296 = por %p294, %p295
      %p297 = scmp.ne.s32.totalorder %s285, %s286
      %p298 = scmp.eq.s32.totalorder %s30, 3
      %p299 = por %p297, %p298
      %p301 = scmp.ne.s32.totalorder %s286, %s300
      %p302 = scmp.eq.s32.totalorder %s30, 0
      %p303 = por %p301, %p302
      %s305 = sadd.s32 %s304, 1
      %p308 = scmp.eq.s32.totalorder %s24, 3
      %p309 = scmp.ne.s32.totalorder %s304, %s306
      %p310 = scmp.eq.s32.totalorder %s24, 0
      %p311 = por %p309, %p310
      %p312 = scmp.ne.s32.totalorder %s304, %s306
      %p313 = scmp.eq.s32.totalorder %s29, 3
      %p314 = por %p312, %p313
      %p315 = scmp.ne.s32.totalorder %s306, %s307
      %p316 = scmp.eq.s32.totalorder %s29, 0
      %p317 = por %p315, %p316
      %p318 = scmp.ne.s32.totalorder %s306, %s307
      %p319 = scmp.eq.s32.totalorder %s30, 3
      %p320 = por %p318, %p319
      %p322 = scmp.ne.s32.totalorder %s307, %s321
      %p323 = scmp.eq.s32.totalorder %s30, 0
      %p324 = por %p322, %p323
      %s326 = sadd.s32 %s325, 1
      %p329 = scmp.eq.s32.totalorder %s24, 3
      %p330 = scmp.ne.s32.totalorder %s325, %s327
      %p331 = scmp.eq.s32.totalorder %s24, 0
      %p332 = por %p330, %p331
      %p333 = scmp.ne.s32.totalorder %s325, %s327
      %p334 = scmp.eq.s32.totalorder %s29, 3
      %p335 = por %p333, %p334
      %p336 = scmp.ne.s32.totalorder %s327, %s328
      %p337 = scmp.eq.s32.totalorder %s29, 0
      %p338 = por %p336, %p337
      %p339 = scmp.ne.s32.totalorder %s327, %s328
      %p340 = scmp.eq.s32.totalorder %s30, 3
      %p341 = por %p339, %p340
      %p343 = scmp.ne.s32.totalorder %s328, %s342
      %p344 = scmp.eq.s32.totalorder %s30, 0
      %p345 = por %p343, %p344
      %s347 = sadd.s32 %s346, 1
      %p350 = scmp.eq.s32.totalorder %s24, 3
      %p351 = scmp.ne.s32.totalorder %s346, %s348
      %p352 = scmp.eq.s32.totalorder %s24, 0
      %p353 = por %p351, %p352
      %p354 = scmp.ne.s32.totalorder %s346, %s348
      %p355 = scmp.eq.s32.totalorder %s29, 3
      %p356 = por %p354, %p355
      %p357 = scmp.ne.s32.totalorder %s348, %s349
      %p358 = scmp.eq.s32.totalorder %s29, 0
      %p359 = por %p357, %p358
      %p360 = scmp.ne.s32.totalorder %s348, %s349
      %p361 = scmp.eq.s32.totalorder %s30, 3
      %p362 = por %p360, %p361
      %p364 = scmp.ne.s32.totalorder %s349, %s363
      %p365 = scmp.eq.s32.totalorder %s30, 0
      %p366 = por %p364, %p365
      %p367 = scmp.le.s32.totalorder 1, %s24
      %p368 = scmp.lt.s32.totalorder %s24, 5
      %p369 = pnand %p367, %p368
      %p370 = pneg %p369
      // Predicated region
      $region9: #{tpu_custom_call.1} parent=5 // pred_check
        _
      $region10: #{tpu_custom_call.1} parent=5 // pred_check_branch
        %372 = sbr.rel (%p369) target = $region12
      $region11: #{tpu_custom_call.1} parent=5 // pred_region
        %s373 = ssub.s32 %s24, 1
        // Predicated region
        $region13: #{tpu_custom_call.1} parent=11 // pred_check
          %p374 = pneg %p45
        $region14: #{tpu_custom_call.1} parent=11 // pred_check_branch
          %376 = sbr.rel (%p374) target = $region16
        $region15: #{tpu_custom_call.1} parent=11 // pred_region
          _
        $region16: #{tpu_custom_call.1} parent=11 // pred_fallthru
          _
        // Predicated region
        $region17: #{tpu_custom_call.1} parent=11 // pred_check
          %p377 = pneg %p66
        $region18: #{tpu_custom_call.1} parent=11 // pred_check_branch
          %379 = sbr.rel (%p377) target = $region20
        $region19: #{tpu_custom_call.1} parent=11 // pred_region
          %s381 = ssub.s32 256, 256
          %382 = vsyncadd [#allocation5], %s381
          %s383 = sshll.u32 [#allocation4], 4
          %s384 = int_to_ptr.vmem [resolvable:$true] %s383
          %389 = dma.hbm_to_vmem [thread:$0]  %s1, 256, %s384, [#allocation5], 128, 128, 8
        $region20: #{tpu_custom_call.1} parent=11 // pred_fallthru
          _
        // Predicated region
        $region21: #{tpu_custom_call.1} parent=11 // pred_check
          %p390 = pneg %p87
        $region22: #{tpu_custom_call.1} parent=11 // pred_check_branch
          %392 = sbr.rel (%p390) target = $region24
        $region23: #{tpu_custom_call.1} parent=11 // pred_region
          _
        $region24: #{tpu_custom_call.1} parent=11 // pred_fallthru
          _
        // Predicated region
        $region25: #{tpu_custom_call.1} parent=11 // pred_check
          %p393 = pneg %p108
        $region26: #{tpu_custom_call.1} parent=11 // pred_check_branch
          %395 = sbr.rel (%p393) target = $region28
        $region27: #{tpu_custom_call.1} parent=11 // pred_region
          _
        $region28: #{tpu_custom_call.1} parent=11 // pred_fallthru
          _
        // Predicated region
        $region29: #{tpu_custom_call.1} parent=11 // pred_check
          %p396 = pneg %p129
        $region30: #{tpu_custom_call.1} parent=11 // pred_check_branch
          %398 = sbr.rel (%p396) target = $region32
        $region31: #{tpu_custom_call.1} parent=11 // pred_region
          %s400 = ssub.s32 16, 16
          %401 = vsyncadd [#allocation8], %s400
          %s403 = sshll.u32 [#allocation7], 4
          %s404 = int_to_ptr.vmem [resolvable:$true] %s403
          %406 = dma.hbm_to_vmem [thread:$0]  %s4, 16, %s404, [#allocation8]
        $region32: #{tpu_custom_call.1} parent=11 // pred_fallthru
          _
        // Predicated region
        $region33: #{tpu_custom_call.1} parent=11 // pred_check
          %p407 = pneg %p254
        $region34: #{tpu_custom_call.1} parent=11 // pred_check_branch
          %409 = sbr.rel (%p407) target = $region36
        $region35: #{tpu_custom_call.1} parent=11 // pred_region
          %s411 = ssub.s32 16, 16
          %412 = vsyncadd [#allocation8], %s411
          %s414 = sshll.u32 [#allocation9], 4
          %s415 = int_to_ptr.vmem [resolvable:$true] %s414
          %417 = dma.hbm_to_vmem [thread:$0]  %s9, 16, %s415, [#allocation8]
        $region36: #{tpu_custom_call.1} parent=11 // pred_fallthru
          _
        // Predicated region
        $region37: #{tpu_custom_call.1} parent=11 // pred_check
          %p418 = pneg %p275
        $region38: #{tpu_custom_call.1} parent=11 // pred_check_branch
          %420 = sbr.rel (%p418) target = $region40
        $region39: #{tpu_custom_call.1} parent=11 // pred_region
          %s422 = ssub.s32 16, 16
          %423 = vsyncadd [#allocation11], %s422
          %s425 = sshll.u32 [#allocation10], 4
          %s426 = int_to_ptr.vmem [resolvable:$true] %s425
          %428 = dma.hbm_to_vmem [thread:$0]  %s10, 16, %s426, [#allocation11]
        $region40: #{tpu_custom_call.1} parent=11 // pred_fallthru
          _
        // Predicated region
        $region41: #{tpu_custom_call.1} parent=11 // pred_check
          %p429 = pneg %p296
        $region42: #{tpu_custom_call.1} parent=11 // pred_check_branch
          %431 = sbr.rel (%p429) target = $region44
        $region43: #{tpu_custom_call.1} parent=11 // pred_region
          %s433 = ssub.s32 16, 16
          %434 = vsyncadd [#allocation11], %s433
          %s436 = sshll.u32 [#allocation12], 4
          %s437 = int_to_ptr.vmem [resolvable:$true] %s436
          %439 = dma.hbm_to_vmem [thread:$0]  %s11, 16, %s437, [#allocation11]
        $region44: #{tpu_custom_call.1} parent=11 // pred_fallthru
          _
        // Predicated region
        $region45: #{tpu_custom_call.1} parent=11 // pred_check
          %p440 = pneg %p317
        $region46: #{tpu_custom_call.1} parent=11 // pred_check_branch
          %442 = sbr.rel (%p440) target = $region48
        $region47: #{tpu_custom_call.1} parent=11 // pred_region
          _
        $region48: #{tpu_custom_call.1} parent=11 // pred_fallthru
          _
        // Predicated region
        $region49: #{tpu_custom_call.1} parent=11 // pred_check
          %p443 = pneg %p338
        $region50: #{tpu_custom_call.1} parent=11 // pred_check_branch
          %445 = sbr.rel (%p443) target = $region52
        $region51: #{tpu_custom_call.1} parent=11 // pred_region
          _
        $region52: #{tpu_custom_call.1} parent=11 // pred_fallthru
          _
      $region12: #{tpu_custom_call.1} parent=5 // pred_fallthru
        _
      %p446 = scmp.lt.s32.totalorder %s24, 4
      // Predicated region
      $region53: #{tpu_custom_call.1} parent=5 // pred_check
        %p447 = pneg %p446
      $region54: #{tpu_custom_call.1} parent=5 // pred_check_branch
        %449 = sbr.rel (%p447) target = $region56
      $region55: #{tpu_custom_call.1} parent=5 // pred_region
        // Predicated region
        $region57: #{tpu_custom_call.1} parent=55 // pred_check
          %p450 = pneg %p149
        $region58: #{tpu_custom_call.1} parent=55 // pred_check_branch
          %452 = sbr.rel (%p450) target = $region60
        $region59: #{tpu_custom_call.1} parent=55 // pred_region
          %p453 = scmp.lt.s32.totalorder %s24, 3
          %s454 = scalar_select %p453, %s24, 3
          %s455 = smul.addr %s454, 4
          %s456 = scalar_lea.vmem %s5, %s455
        $region60: #{tpu_custom_call.1} parent=55 // pred_fallthru
          _
        // Predicated region
        $region61: #{tpu_custom_call.1} parent=55 // pred_check
          %p457 = pneg %p175
        $region62: #{tpu_custom_call.1} parent=55 // pred_check_branch
          %459 = sbr.rel (%p457) target = $region64
        $region63: #{tpu_custom_call.1} parent=55 // pred_region
          %p460 = scmp.lt.s32.totalorder %s24, 3
          %s461 = scalar_select %p460, %s24, 3
          %s462 = smul.addr %s461, 4
          %s463 = scalar_lea.vmem %s6, %s462
        $region64: #{tpu_custom_call.1} parent=55 // pred_fallthru
          _
        // Predicated region
        $region65: #{tpu_custom_call.1} parent=55 // pred_check
          %p464 = pneg %p201
        $region66: #{tpu_custom_call.1} parent=55 // pred_check_branch
          %466 = sbr.rel (%p464) target = $region68
        $region67: #{tpu_custom_call.1} parent=55 // pred_region
          %p467 = scmp.lt.s32.totalorder %s24, 3
          %s468 = scalar_select %p467, %s24, 3
          %s469 = scalar_lea.vmem %s7, %s468
        $region68: #{tpu_custom_call.1} parent=55 // pred_fallthru
          _
        // Predicated region
        $region69: #{tpu_custom_call.1} parent=55 // pred_check
          %p470 = pneg %p227
        $region70: #{tpu_custom_call.1} parent=55 // pred_check_branch
          %472 = sbr.rel (%p470) target = $region72
        $region71: #{tpu_custom_call.1} parent=55 // pred_region
          %p473 = scmp.lt.s32.totalorder %s24, 3
          %s474 = scalar_select %p473, %s24, 3
          %s475 = smul.addr %s474, 4
          %s476 = scalar_lea.vmem %s8, %s475
        $region72: #{tpu_custom_call.1} parent=55 // pred_fallthru
          _
      $region56: #{tpu_custom_call.1} parent=5 // pred_fallthru
        _
      %p477 = scmp.le.s32.totalorder 1, %s24
      %p478 = scmp.lt.s32.totalorder %s24, 5
      %p479 = pnand %p477, %p478
      %p480 = pneg %p479
      // Predicated region
      $region73: #{tpu_custom_call.1} parent=5 // pred_check
        _
      $region74: #{tpu_custom_call.1} parent=5 // pred_check_branch
        %482 = sbr.rel (%p479) target = $region76
      $region75: #{tpu_custom_call.1} parent=5 // pred_region
        %s483 = ssub.s32 %s24, 1
        // Predicated region
        $region77: #{tpu_custom_call.1} parent=75 // pred_check
          %p484 = pneg %p66
        $region78: #{tpu_custom_call.1} parent=75 // pred_check_branch
          %486 = sbr.rel (%p484) target = $region80
        $region79: #{tpu_custom_call.1} parent=75 // pred_region
          %487 = dma.done [#allocation5], 256
        $region80: #{tpu_custom_call.1} parent=75 // pred_fallthru
          _
        // Predicated region
        $region81: #{tpu_custom_call.1} parent=75 // pred_check
          %p488 = pneg %p129
        $region82: #{tpu_custom_call.1} parent=75 // pred_check_branch
          %490 = sbr.rel (%p488) target = $region84
        $region83: #{tpu_custom_call.1} parent=75 // pred_region
          %491 = dma.done [#allocation8], 16
        $region84: #{tpu_custom_call.1} parent=75 // pred_fallthru
          _
        // Predicated region
        $region85: #{tpu_custom_call.1} parent=75 // pred_check
          %p492 = pneg %p254
        $region86: #{tpu_custom_call.1} parent=75 // pred_check_branch
          %494 = sbr.rel (%p492) target = $region88
        $region87: #{tpu_custom_call.1} parent=75 // pred_region
          %495 = dma.done [#allocation8], 16
        $region88: #{tpu_custom_call.1} parent=75 // pred_fallthru
          _
        // Predicated region
        $region89: #{tpu_custom_call.1} parent=75 // pred_check
          %p496 = pneg %p275
        $region90: #{tpu_custom_call.1} parent=75 // pred_check_branch
          %498 = sbr.rel (%p496) target = $region92
        $region91: #{tpu_custom_call.1} parent=75 // pred_region
          %499 = dma.done [#allocation11], 16
        $region92: #{tpu_custom_call.1} parent=75 // pred_fallthru
          _
        // Predicated region
        $region93: #{tpu_custom_call.1} parent=75 // pred_check
          %p500 = pneg %p296
        $region94: #{tpu_custom_call.1} parent=75 // pred_check_branch
          %502 = sbr.rel (%p500) target = $region96
        $region95: #{tpu_custom_call.1} parent=75 // pred_region
          %503 = dma.done [#allocation11], 16
        $region96: #{tpu_custom_call.1} parent=75 // pred_fallthru
          _
        %p504 = pneg %p45
        %p505 = pneg %p42
        %p506 = pneg %p66
        %p507 = pneg %p63
        %p508 = pneg %p87
        %p509 = pneg %p84
        %p510 = pneg %p108
        %p511 = pneg %p105
        %p512 = pneg %p129
        %p513 = pneg %p126
        %p514 = scmp.lt.s32.totalorder %s29, 3
        %s515 = scalar_select %p514, %s29, 3
        %s516 = smul.addr %s515, 4
        %s517 = scalar_lea.vmem %s5, %s516
        %p518 = pneg %p155
        %p519 = pneg %p152
        %p520 = scmp.lt.s32.totalorder %s29, 3
        %s521 = scalar_select %p520, %s29, 3
        %s522 = smul.addr %s521, 4
        %s523 = scalar_lea.vmem %s6, %s522
        %p524 = pneg %p181
        %p525 = pneg %p178
        %p526 = scmp.lt.s32.totalorder %s29, 3
        %s527 = scalar_select %p526, %s29, 3
        %s528 = scalar_lea.vmem %s7, %s527
        %p529 = pneg %p207
        %p530 = pneg %p204
        %p531 = scmp.lt.s32.totalorder %s29, 3
        %s532 = scalar_select %p531, %s29, 3
        %s533 = smul.addr %s532, 4
        %s534 = scalar_lea.vmem %s8, %s533
        %p535 = pneg %p233
        %p536 = pneg %p230
        %p537 = pneg %p254
        %p538 = pneg %p251
        %p539 = pneg %p275
        %p540 = pneg %p272
        %p541 = pneg %p296
        %p542 = pneg %p293
        %p543 = pneg %p317
        %p544 = pneg %p314
        %p545 = pneg %p338
        %p546 = pneg %p335
        %p547 = pneg %p359
        %p548 = pneg %p356
        %p549 = scmp.lt.s32.totalorder %s29, 3
        %s550 = scalar_select %p549, %s29, 3
        %s551 = smul.addr %s550, 4
        %s552 = scalar_lea.vmem %s5, %s551
        %p553 = scmp.lt.s32.totalorder %s29, 3
        %s554 = scalar_select %p553, %s29, 3
        %s555 = smul.addr %s554, 4
        %s556 = scalar_lea.vmem %s6, %s555
        %p557 = scmp.lt.s32.totalorder %s29, 3
        %s558 = scalar_select %p557, %s29, 3
        %s559 = scalar_lea.vmem %s7, %s558
        %p560 = scmp.lt.s32.totalorder %s29, 3
        %s561 = scalar_select %p560, %s29, 3
        %s562 = smul.addr %s561, 4
        %s563 = scalar_lea.vmem %s8, %s562
        %v565 = vld [vmem:[#allocation4] sm:$0xff]
        %v566 = vld [vmem:[#allocation4 + $0x8] sm:$0xff]
        %p567 = scmp.eq.s32.totalorder %s29, 0
        // Predicated region
        $region97: #{tpu_custom_call.1} parent=75 // pred_check
          %p568 = pneg %p567
        $region98: #{tpu_custom_call.1} parent=75 // pred_check_branch
          %570 = sbr.rel (%p568) target = $region100
        $region99: #{tpu_custom_call.1} parent=75 // pred_region
          %v571 = vld [vmem:[%s0] sm:$0xff]
          %v572 = vld [vmem:[%s0 + $0x8] sm:$0xff]
          %v573 = vld [vmem:[%s2] sm:$0x7]
          %v574 = vld [vmem:[%s3] sm:$0x7]
          %v575 = vld [vmem:[#allocation7] sm:$0x1]
          %vm576 = vcmask 23552
          %v578 = vsel %vm576, %v571, 0
          %v581 = vsel %vm576, %v572, 0
          %vm583 = vcmask 1042432
          %v585 = vsel %vm583, %v573, 0
          %587 = vmatprep.subr.mxu0 0.0
          %588 = vmatpush1.msra.mxu0 0.0
          %589 = vmatprep.subr.mxu0 0.0
          %590 = vmatpush1.msra.mxu0 0.0
          %591 = vmatprep.subr.mxu0 0.0
          %592 = vmatpush1.msra.mxu0 0.0
          %593 = vmatprep.subr.mxu0 0.0
          %594 = vmatpush1.msra.mxu0 0.0
          %595 = vmatprep.subr.mxu0 0.0
          %596 = vmatpush1.msra.mxu0 0.0
          %597 = vmatprep.subr.mxu0 0.0
          %598 = vmatpush1.msra.mxu0 0.0
          %599 = vmatprep.subr.mxu0 0.0
          %600 = vmatpush1.msra.mxu0 0.0
          %601 = vmatprep.subr.mxu0 0.0
          %602 = vmatpush1.msra.mxu0 0.0
          %603 = vmatprep.subr.mxu0 0.0
          %604 = vmatpush1.msra.mxu0 0.0
          %605 = vmatprep.subr.mxu0 0.0
          %606 = vmatpush1.msra.mxu0 0.0
          %607 = vmatprep.subr.mxu0 0.0
          %608 = vmatpush1.msra.mxu0 0.0
          %609 = vmatprep.subr.mxu0 0.0
          %610 = vmatpush1.msra.mxu0 0.0
          %611 = vmatprep.subr.mxu0 0.0
          %612 = vmatpush1.msra.mxu0 0.0
          %613 = vmatprep.subr.mxu0 0.0
          %614 = vmatpush1.msra.mxu0 0.0
          %615 = vmatprep.subr.mxu0 0.0
          %616 = vmatpush1.msra.mxu0 0.0
          %617 = vmatprep.subr.mxu0 0.0
          %618 = vmatpush1.msra.mxu0 %v585
          %619 = vmatprep.subr.mxu0 0.0
          %620 = vmatpush2.msra.mxu0 0.0
          %621 = vmatprep.subr.mxu0 0.0
          %622 = vmatpush2.msra.mxu0 0.0
          %623 = vmatprep.subr.mxu0 0.0
          %624 = vmatpush2.msra.mxu0 0.0
          %625 = vmatprep.subr.mxu0 0.0
          %626 = vmatpush2.msra.mxu0 0.0
          %627 = vmatprep.subr.mxu0 0.0
          %628 = vmatpush2.msra.mxu0 0.0
          %629 = vmatprep.subr.mxu0 0.0
          %630 = vmatpush2.msra.mxu0 0.0
          %631 = vmatprep.subr.mxu0 0.0
          %632 = vmatpush2.msra.mxu0 0.0
          %633 = vmatprep.subr.mxu0 0.0
          %634 = vmatpush2.msra.mxu0 0.0
          %635 = vmatprep.subr.mxu0 0.0
          %636 = vmatpush2.msra.mxu0 0.0
          %637 = vmatprep.subr.mxu0 0.0
          %638 = vmatpush2.msra.mxu0 0.0
          %639 = vmatprep.subr.mxu0 0.0
          %640 = vmatpush2.msra.mxu0 0.0
          %641 = vmatprep.subr.mxu0 0.0
          %642 = vmatpush2.msra.mxu0 0.0
          %643 = vmatprep.subr.mxu0 0.0
          %644 = vmatpush2.msra.mxu0 0.0
          %645 = vmatprep.subr.mxu0 0.0
          %646 = vmatpush2.msra.mxu0 0.0
          %647 = vmatprep.subr.mxu0 0.0
          %648 = vmatpush2.msra.mxu0 0.0
          %649 = vmatprep.subr.mxu0 0.0
          %650 = vmatpush2.msra.mxu0 0.0
          %651 = vmatprep.mubr.f32.mxu0 0.0
          %652 = vmatmul.mubr.f32.gmra.mxu0 %v578
          %v653 = vpop.f32.mrf.mxu0
          %v654 = vadd.f32 0.0, %v653
          %v655 = vpop.f32.mrf.mxu0
          %656 = vmatprep.mubr.f32.mxu0 0.0
          %657 = vmatmul.mubr.f32.gmra.mxu0 %v581
          %v658 = vpop.f32.mrf.mxu0
          %v659 = vadd.f32 0.0, %v658
          %v660 = vpop.f32.mrf.mxu0
          %661 = vdwg.mxu0
          %v663 = vsel %vm583, %v574, 0
          %665 = vmatprep.subr.mxu0 0.0
          %666 = vmatpush1.msra.mxu0 0.0
          %667 = vmatprep.subr.mxu0 0.0
          %668 = vmatpush1.msra.mxu0 0.0
          %669 = vmatprep.subr.mxu0 0.0
          %670 = vmatpush1.msra.mxu0 0.0
          %671 = vmatprep.subr.mxu0 0.0
          %672 = vmatpush1.msra.mxu0 0.0
          %673 = vmatprep.subr.mxu0 0.0
          %674 = vmatpush1.msra.mxu0 0.0
          %675 = vmatprep.subr.mxu0 0.0
          %676 = vmatpush1.msra.mxu0 0.0
          %677 = vmatprep.subr.mxu0 0.0
          %678 = vmatpush1.msra.mxu0 0.0
          %679 = vmatprep.subr.mxu0 0.0
          %680 = vmatpush1.msra.mxu0 0.0
          %681 = vmatprep.subr.mxu0 0.0
          %682 = vmatpush1.msra.mxu0 0.0
          %683 = vmatprep.subr.mxu0 0.0
          %684 = vmatpush1.msra.mxu0 0.0
          %685 = vmatprep.subr.mxu0 0.0
          %686 = vmatpush1.msra.mxu0 0.0
          %687 = vmatprep.subr.mxu0 0.0
          %688 = vmatpush1.msra.mxu0 0.0
          %689 = vmatprep.subr.mxu0 0.0
          %690 = vmatpush1.msra.mxu0 0.0
          %691 = vmatprep.subr.mxu0 0.0
          %692 = vmatpush1.msra.mxu0 0.0
          %693 = vmatprep.subr.mxu0 0.0
          %694 = vmatpush1.msra.mxu0 0.0
          %695 = vmatprep.subr.mxu0 0.0
          %696 = vmatpush1.msra.mxu0 %v663
          %697 = vmatprep.subr.mxu0 0.0
          %698 = vmatpush2.msra.mxu0 0.0
          %699 = vmatprep.subr.mxu0 0.0
          %700 = vmatpush2.msra.mxu0 0.0
          %701 = vmatprep.subr.mxu0 0.0
          %702 = vmatpush2.msra.mxu0 0.0
          %703 = vmatprep.subr.mxu0 0.0
          %704 = vmatpush2.msra.mxu0 0.0
          %705 = vmatprep.subr.mxu0 0.0
          %706 = vmatpush2.msra.mxu0 0.0
          %707 = vmatprep.subr.mxu0 0.0
          %708 = vmatpush2.msra.mxu0 0.0
          %709 = vmatprep.subr.mxu0 0.0
          %710 = vmatpush2.msra.mxu0 0.0
          %711 = vmatprep.subr.mxu0 0.0
          %712 = vmatpush2.msra.mxu0 0.0
          %713 = vmatprep.subr.mxu0 0.0
          %714 = vmatpush2.msra.mxu0 0.0
          %715 = vmatprep.subr.mxu0 0.0
          %716 = vmatpush2.msra.mxu0 0.0
          %717 = vmatprep.subr.mxu0 0.0
          %718 = vmatpush2.msra.mxu0 0.0
          %719 = vmatprep.subr.mxu0 0.0
          %720 = vmatpush2.msra.mxu0 0.0
          %721 = vmatprep.subr.mxu0 0.0
          %722 = vmatpush2.msra.mxu0 0.0
          %723 = vmatprep.subr.mxu0 0.0
          %724 = vmatpush2.msra.mxu0 0.0
          %725 = vmatprep.subr.mxu0 0.0
          %726 = vmatpush2.msra.mxu0 0.0
          %727 = vmatprep.subr.mxu0 0.0
          %728 = vmatpush2.msra.mxu0 0.0
          %729 = vmatprep.mubr.f32.mxu0 0.0
          %730 = vmatmul.mubr.f32.gmra.mxu0 %v578
          %v731 = vpop.f32.mrf.mxu0
          %v732 = vadd.f32 0.0, %v731
          %v733 = vpop.f32.mrf.mxu0
          %734 = vmatprep.mubr.f32.mxu0 0.0
          %735 = vmatmul.mubr.f32.gmra.mxu0 %v581
          %v736 = vpop.f32.mrf.mxu0
          %v737 = vadd.f32 0.0, %v736
          %v738 = vpop.f32.mrf.mxu0
          %739 = vdwg.mxu0
          %740 = vxpose.xlu0.b32.start [1/16] %v732, 128
          %741 = vxpose.xlu0.b32.cont [2/16] %v737, 128
          %742 = vxpose.xlu0.b32.cont [3/16] 0.0, 128
          %743 = vxpose.xlu0.b32.cont [4/16] 0.0, 128
          %744 = vxpose.xlu0.b32.cont [5/16] 0.0, 128
          %745 = vxpose.xlu0.b32.cont [6/16] 0.0, 128
          %746 = vxpose.xlu0.b32.cont [7/16] 0.0, 128
          %747 = vxpose.xlu0.b32.cont [8/16] 0.0, 128
          %748 = vxpose.xlu0.b32.cont [9/16] 0.0, 128
          %749 = vxpose.xlu0.b32.cont [10/16] 0.0, 128
          %750 = vxpose.xlu0.b32.cont [11/16] 0.0, 128
          %751 = vxpose.xlu0.b32.cont [12/16] 0.0, 128
          %752 = vxpose.xlu0.b32.cont [13/16] 0.0, 128
          %753 = vxpose.xlu0.b32.cont [14/16] 0.0, 128
          %754 = vxpose.xlu0.b32.cont [15/16] 0.0, 128
          %755 = vxpose.xlu0.b32.end [16/16] 0.0, 128
          %v756 = vpop.trf.xlu0
          %v757 = vpop.trf.xlu0
          %v758 = vpop.trf.xlu0
          %v759 = vpop.trf.xlu0
          %v760 = vpop.trf.xlu0
          %v761 = vpop.trf.xlu0
          %v762 = vpop.trf.xlu0
          %v763 = vpop.trf.xlu0
          %v764 = vpop.trf.xlu0
          %v765 = vpop.trf.xlu0
          %v766 = vpop.trf.xlu0
          %v767 = vpop.trf.xlu0
          %v768 = vpop.trf.xlu0
          %v769 = vpop.trf.xlu0
          %v770 = vpop.trf.xlu0
          %v771 = vpop.trf.xlu0
          %773 = vset.pattern.permute.xlu0 1
          %774 = vperm.xlu0 %773, %v732
          %v775 = vpop.permute.xlu0 %774
          %778 = vset.pattern.permute.xlu0 1
          %779 = vperm.xlu0 %778, %v737
          %v780 = vpop.permute.xlu0 %779
          %v782 = vlaneseq
          %v783 = vshrl.u32 %v782, 7
          %v784 = vsub.s32 0, %v783
          %v785 = vrot.slane %v756, %v784
          %v786 = vadd.f32 %v775, %v785
          %v787 = vadd.f32 %v780, %v785
          %v788 = vmul.f32 %v786, 0.2
          %v789 = vmul.f32 %v787, 0.2
          %v790 = vmax.f32 %v786, %v788
          %v791 = vmax.f32 %v787, %v789
          %v792 = vadd.f32 %v790, %v565
          %v793 = vadd.f32 %v791, %v566
          %vm794 = vcmask 130048
          %v795 = vsel %vm794, %v792, -inf
          %796 = vmax.xlane.f32.xlu0 %v795
          %v797 = vpop.xlane.xlu0 %796
          %v798 = vsel %vm794, %v793, -inf
          %799 = vmax.xlane.f32.xlu0 %v798
          %v800 = vpop.xlane.xlu0 %799
          %v801 = vsub.f32 %v792, %v797
          %v802 = vsub.f32 %v793, %v800
          %v803 = vmul.f32 %v801, 1.442695
          %v804 = vpow.pop %v803
          %v805 = vmul.f32 %v802, 1.442695
          %v806 = vpow.pop %v805
          %v807 = vsel %vm794, %v804, 0.0
          %808 = vadd.xlane.f32.xlu0 %v807
          %v809 = vpop.xlane.xlu0 %808
          %v810 = vsel %vm794, %v806, 0.0
          %811 = vadd.xlane.f32.xlu0 %v810
          %v812 = vpop.xlane.xlu0 %811
          %v813 = vpack.c.bf16 %v806, %v804
          %v814 = vpack.c.bf16 %v659, %v654
          %v816 = vsel %vm794, %v813, 0
          %818 = vmatprep.subr.bf16.mxu0 0
          %819 = vmatpush1.bf16.msra.mxu0 0
          %820 = vmatprep.subr.bf16.mxu0 0
          %821 = vmatpush1.bf16.msra.mxu0 0
          %822 = vmatprep.subr.bf16.mxu0 0
          %823 = vmatpush1.bf16.msra.mxu0 0
          %824 = vmatprep.subr.bf16.mxu0 0
          %825 = vmatpush1.bf16.msra.mxu0 0
          %826 = vmatprep.subr.bf16.mxu0 0
          %827 = vmatpush1.bf16.msra.mxu0 0
          %828 = vmatprep.subr.bf16.mxu0 0
          %829 = vmatpush1.bf16.msra.mxu0 0
          %830 = vmatprep.subr.bf16.mxu0 0
          %831 = vmatpush1.bf16.msra.mxu0 0
          %832 = vmatprep.subr.bf16.mxu0 0
          %833 = vmatpush1.bf16.msra.mxu0 %v814
          %834 = vmatprep.subr.bf16.mxu0 0
          %835 = vmatpush2.bf16.msra.mxu0 0
          %836 = vmatprep.subr.bf16.mxu0 0
          %837 = vmatpush2.bf16.msra.mxu0 0
          %838 = vmatprep.subr.bf16.mxu0 0
          %839 = vmatpush2.bf16.msra.mxu0 0
          %840 = vmatprep.subr.bf16.mxu0 0
          %841 = vmatpush2.bf16.msra.mxu0 0
          %842 = vmatprep.subr.bf16.mxu0 0
          %843 = vmatpush2.bf16.msra.mxu0 0
          %844 = vmatprep.subr.bf16.mxu0 0
          %845 = vmatpush2.bf16.msra.mxu0 0
          %846 = vmatprep.subr.bf16.mxu0 0
          %847 = vmatpush2.bf16.msra.mxu0 0
          %848 = vmatprep.subr.bf16.mxu0 0
          %849 = vmatpush2.bf16.msra.mxu0 0
          %850 = vmatprep.mubr.bf16.mxu0 0
          %851 = vmatmul.mubr.bf16.gmra.mxu0 %v816
          %v852 = vpop.f32.mrf.mxu0
          %v853 = vadd.f32 0.0, %v852
          %v854 = vpop.f32.mrf.mxu0
          %v855 = vpop.f32.mrf.mxu0
          %v856 = vadd.f32 0.0, %v855
          %v857 = vpop.f32.mrf.mxu0
          %858 = vdwg.mxu0
          %v859 = vrcp.pop %v809
          %v860 = vrcp.pop %v812
          %v861 = vmul.f32 %v853, %v859
          %v862 = vmul.f32 %v856, %v860
          %v864 = vlaneseq
          %v865 = vshrl.u32 %v864, 7
          %v866 = vsub.s32 0, %v865
          %v867 = vrot.slane %v575, %v866
          %v869 = vadd.f32 %v861, %v867
          %v870 = vadd.f32 %v862, %v867
          %v871 = vmax.f32 %v869, 0.0
          %v872 = vmax.f32 %v870, 0.0
          %873 = vst.msk [vmem:[#allocation2] sm:$0xff] %vm576, %v871
          %874 = vst.msk [vmem:[#allocation2 + $0x8] sm:$0xff] %vm576, %v872
          %875 = vst [vmem:[#allocation3] sm:$0xff] 0.0
          %876 = vst [vmem:[#allocation3 + $0x8] sm:$0xff] 0.0
        $region100: #{tpu_custom_call.1} parent=75 // pred_fallthru
          _
        %v877 = vld [vmem:[#allocation2] sm:$0xff]
        %v878 = vld [vmem:[#allocation2 + $0x8] sm:$0xff]
        %v879 = vld [vmem:[%s552] sm:$0x7]
        %v880 = vld [vmem:[%s556] sm:$0x7]
        %v881 = vld [vmem:[%s559] sm:$0x1]
        %vm882 = vcmask 23552
        %v884 = vsel %vm882, %v877, 0
        %v887 = vsel %vm882, %v878, 0
        %vm889 = vcmask 1042432
        %v891 = vsel %vm889, %v879, 0
        %893 = vmatprep.subr.mxu0 0.0
        %894 = vmatpush1.msra.mxu0 0.0
        %895 = vmatprep.subr.mxu0 0.0
        %896 = vmatpush1.msra.mxu0 0.0
        %897 = vmatprep.subr.mxu0 0.0
        %898 = vmatpush1.msra.mxu0 0.0
        %899 = vmatprep.subr.mxu0 0.0
        %900 = vmatpush1.msra.mxu0 0.0
        %901 = vmatprep.subr.mxu0 0.0
        %902 = vmatpush1.msra.mxu0 0.0
        %903 = vmatprep.subr.mxu0 0.0
        %904 = vmatpush1.msra.mxu0 0.0
        %905 = vmatprep.subr.mxu0 0.0
        %906 = vmatpush1.msra.mxu0 0.0
        %907 = vmatprep.subr.mxu0 0.0
        %908 = vmatpush1.msra.mxu0 0.0
        %909 = vmatprep.subr.mxu0 0.0
        %910 = vmatpush1.msra.mxu0 0.0
        %911 = vmatprep.subr.mxu0 0.0
        %912 = vmatpush1.msra.mxu0 0.0
        %913 = vmatprep.subr.mxu0 0.0
        %914 = vmatpush1.msra.mxu0 0.0
        %915 = vmatprep.subr.mxu0 0.0
        %916 = vmatpush1.msra.mxu0 0.0
        %917 = vmatprep.subr.mxu0 0.0
        %918 = vmatpush1.msra.mxu0 0.0
        %919 = vmatprep.subr.mxu0 0.0
        %920 = vmatpush1.msra.mxu0 0.0
        %921 = vmatprep.subr.mxu0 0.0
        %922 = vmatpush1.msra.mxu0 0.0
        %923 = vmatprep.subr.mxu0 0.0
        %924 = vmatpush1.msra.mxu0 %v891
        %925 = vmatprep.subr.mxu0 0.0
        %926 = vmatpush2.msra.mxu0 0.0
        %927 = vmatprep.subr.mxu0 0.0
        %928 = vmatpush2.msra.mxu0 0.0
        %929 = vmatprep.subr.mxu0 0.0
        %930 = vmatpush2.msra.mxu0 0.0
        %931 = vmatprep.subr.mxu0 0.0
        %932 = vmatpush2.msra.mxu0 0.0
        %933 = vmatprep.subr.mxu0 0.0
        %934 = vmatpush2.msra.mxu0 0.0
        %935 = vmatprep.subr.mxu0 0.0
        %936 = vmatpush2.msra.mxu0 0.0
        %937 = vmatprep.subr.mxu0 0.0
        %938 = vmatpush2.msra.mxu0 0.0
        %939 = vmatprep.subr.mxu0 0.0
        %940 = vmatpush2.msra.mxu0 0.0
        %941 = vmatprep.subr.mxu0 0.0
        %942 = vmatpush2.msra.mxu0 0.0
        %943 = vmatprep.subr.mxu0 0.0
        %944 = vmatpush2.msra.mxu0 0.0
        %945 = vmatprep.subr.mxu0 0.0
        %946 = vmatpush2.msra.mxu0 0.0
        %947 = vmatprep.subr.mxu0 0.0
        %948 = vmatpush2.msra.mxu0 0.0
        %949 = vmatprep.subr.mxu0 0.0
        %950 = vmatpush2.msra.mxu0 0.0
        %951 = vmatprep.subr.mxu0 0.0
        %952 = vmatpush2.msra.mxu0 0.0
        %953 = vmatprep.subr.mxu0 0.0
        %954 = vmatpush2.msra.mxu0 0.0
        %955 = vmatprep.subr.mxu0 0.0
        %956 = vmatpush2.msra.mxu0 0.0
        %957 = vmatprep.mubr.f32.mxu0 0.0
        %958 = vmatmul.mubr.f32.gmra.mxu0 %v884
        %v959 = vpop.f32.mrf.mxu0
        %v960 = vadd.f32 0.0, %v959
        %v961 = vpop.f32.mrf.mxu0
        %962 = vmatprep.mubr.f32.mxu0 0.0
        %963 = vmatmul.mubr.f32.gmra.mxu0 %v887
        %v964 = vpop.f32.mrf.mxu0
        %v965 = vadd.f32 0.0, %v964
        %v966 = vpop.f32.mrf.mxu0
        %967 = vdwg.mxu0
        %v969 = vsel %vm889, %v880, 0
        %971 = vmatprep.subr.mxu0 0.0
        %972 = vmatpush1.msra.mxu0 0.0
        %973 = vmatprep.subr.mxu0 0.0
        %974 = vmatpush1.msra.mxu0 0.0
        %975 = vmatprep.subr.mxu0 0.0
        %976 = vmatpush1.msra.mxu0 0.0
        %977 = vmatprep.subr.mxu0 0.0
        %978 = vmatpush1.msra.mxu0 0.0
        %979 = vmatprep.subr.mxu0 0.0
        %980 = vmatpush1.msra.mxu0 0.0
        %981 = vmatprep.subr.mxu0 0.0
        %982 = vmatpush1.msra.mxu0 0.0
        %983 = vmatprep.subr.mxu0 0.0
        %984 = vmatpush1.msra.mxu0 0.0
        %985 = vmatprep.subr.mxu0 0.0
        %986 = vmatpush1.msra.mxu0 0.0
        %987 = vmatprep.subr.mxu0 0.0
        %988 = vmatpush1.msra.mxu0 0.0
        %989 = vmatprep.subr.mxu0 0.0
        %990 = vmatpush1.msra.mxu0 0.0
        %991 = vmatprep.subr.mxu0 0.0
        %992 = vmatpush1.msra.mxu0 0.0
        %993 = vmatprep.subr.mxu0 0.0
        %994 = vmatpush1.msra.mxu0 0.0
        %995 = vmatprep.subr.mxu0 0.0
        %996 = vmatpush1.msra.mxu0 0.0
        %997 = vmatprep.subr.mxu0 0.0
        %998 = vmatpush1.msra.mxu0 0.0
        %999 = vmatprep.subr.mxu0 0.0
        %1000 = vmatpush1.msra.mxu0 0.0
        %1001 = vmatprep.subr.mxu0 0.0
        %1002 = vmatpush1.msra.mxu0 %v969
        %1003 = vmatprep.subr.mxu0 0.0
        %1004 = vmatpush2.msra.mxu0 0.0
        %1005 = vmatprep.subr.mxu0 0.0
        %1006 = vmatpush2.msra.mxu0 0.0
        %1007 = vmatprep.subr.mxu0 0.0
        %1008 = vmatpush2.msra.mxu0 0.0
        %1009 = vmatprep.subr.mxu0 0.0
        %1010 = vmatpush2.msra.mxu0 0.0
        %1011 = vmatprep.subr.mxu0 0.0
        %1012 = vmatpush2.msra.mxu0 0.0
        %1013 = vmatprep.subr.mxu0 0.0
        %1014 = vmatpush2.msra.mxu0 0.0
        %1015 = vmatprep.subr.mxu0 0.0
        %1016 = vmatpush2.msra.mxu0 0.0
        %1017 = vmatprep.subr.mxu0 0.0
        %1018 = vmatpush2.msra.mxu0 0.0
        %1019 = vmatprep.subr.mxu0 0.0
        %1020 = vmatpush2.msra.mxu0 0.0
        %1021 = vmatprep.subr.mxu0 0.0
        %1022 = vmatpush2.msra.mxu0 0.0
        %1023 = vmatprep.subr.mxu0 0.0
        %1024 = vmatpush2.msra.mxu0 0.0
        %1025 = vmatprep.subr.mxu0 0.0
        %1026 = vmatpush2.msra.mxu0 0.0
        %1027 = vmatprep.subr.mxu0 0.0
        %1028 = vmatpush2.msra.mxu0 0.0
        %1029 = vmatprep.subr.mxu0 0.0
        %1030 = vmatpush2.msra.mxu0 0.0
        %1031 = vmatprep.subr.mxu0 0.0
        %1032 = vmatpush2.msra.mxu0 0.0
        %1033 = vmatprep.subr.mxu0 0.0
        %1034 = vmatpush2.msra.mxu0 0.0
        %1035 = vmatprep.mubr.f32.mxu0 0.0
        %1036 = vmatmul.mubr.f32.gmra.mxu0 %v884
        %v1037 = vpop.f32.mrf.mxu0
        %v1038 = vadd.f32 0.0, %v1037
        %v1039 = vpop.f32.mrf.mxu0
        %1040 = vmatprep.mubr.f32.mxu0 0.0
        %1041 = vmatmul.mubr.f32.gmra.mxu0 %v887
        %v1042 = vpop.f32.mrf.mxu0
        %v1043 = vadd.f32 0.0, %v1042
        %v1044 = vpop.f32.mrf.mxu0
        %1045 = vdwg.mxu0
        %1046 = vxpose.xlu0.b32.start [1/16] %v1038, 128
        %1047 = vxpose.xlu0.b32.cont [2/16] %v1043, 128
        %1048 = vxpose.xlu0.b32.cont [3/16] 0.0, 128
        %1049 = vxpose.xlu0.b32.cont [4/16] 0.0, 128
        %1050 = vxpose.xlu0.b32.cont [5/16] 0.0, 128
        %1051 = vxpose.xlu0.b32.cont [6/16] 0.0, 128
        %1052 = vxpose.xlu0.b32.cont [7/16] 0.0, 128
        %1053 = vxpose.xlu0.b32.cont [8/16] 0.0, 128
        %1054 = vxpose.xlu0.b32.cont [9/16] 0.0, 128
        %1055 = vxpose.xlu0.b32.cont [10/16] 0.0, 128
        %1056 = vxpose.xlu0.b32.cont [11/16] 0.0, 128
        %1057 = vxpose.xlu0.b32.cont [12/16] 0.0, 128
        %1058 = vxpose.xlu0.b32.cont [13/16] 0.0, 128
        %1059 = vxpose.xlu0.b32.cont [14/16] 0.0, 128
        %1060 = vxpose.xlu0.b32.cont [15/16] 0.0, 128
        %1061 = vxpose.xlu0.b32.end [16/16] 0.0, 128
        %v1062 = vpop.trf.xlu0
        %v1063 = vpop.trf.xlu0
        %v1064 = vpop.trf.xlu0
        %v1065 = vpop.trf.xlu0
        %v1066 = vpop.trf.xlu0
        %v1067 = vpop.trf.xlu0
        %v1068 = vpop.trf.xlu0
        %v1069 = vpop.trf.xlu0
        %v1070 = vpop.trf.xlu0
        %v1071 = vpop.trf.xlu0
        %v1072 = vpop.trf.xlu0
        %v1073 = vpop.trf.xlu0
        %v1074 = vpop.trf.xlu0
        %v1075 = vpop.trf.xlu0
        %v1076 = vpop.trf.xlu0
        %v1077 = vpop.trf.xlu0
        %1079 = vset.pattern.permute.xlu0 1
        %1080 = vperm.xlu0 %1079, %v1038
        %v1081 = vpop.permute.xlu0 %1080
        %1084 = vset.pattern.permute.xlu0 1
        %1085 = vperm.xlu0 %1084, %v1043
        %v1086 = vpop.permute.xlu0 %1085
        %v1088 = vlaneseq
        %v1089 = vshrl.u32 %v1088, 7
        %v1090 = vsub.s32 0, %v1089
        %v1091 = vrot.slane %v1062, %v1090
        %v1092 = vadd.f32 %v1081, %v1091
        %v1093 = vadd.f32 %v1086, %v1091
        %v1094 = vmul.f32 %v1092, 0.2
        %v1095 = vmul.f32 %v1093, 0.2
        %v1096 = vmax.f32 %v1092, %v1094
        %v1097 = vmax.f32 %v1093, %v1095
        %v1098 = vadd.f32 %v1096, %v565
        %v1099 = vadd.f32 %v1097, %v566
        %vm1100 = vcmask 130048
        %v1101 = vsel %vm1100, %v1098, -inf
        %1102 = vmax.xlane.f32.xlu0 %v1101
        %v1103 = vpop.xlane.xlu0 %1102
        %v1104 = vsel %vm1100, %v1099, -inf
        %1105 = vmax.xlane.f32.xlu0 %v1104
        %v1106 = vpop.xlane.xlu0 %1105
        %v1107 = vsub.f32 %v1098, %v1103
        %v1108 = vsub.f32 %v1099, %v1106
        %v1109 = vmul.f32 %v1107, 1.442695
        %v1110 = vpow.pop %v1109
        %v1111 = vmul.f32 %v1108, 1.442695
        %v1112 = vpow.pop %v1111
        %v1113 = vsel %vm1100, %v1110, 0.0
        %1114 = vadd.xlane.f32.xlu0 %v1113
        %v1115 = vpop.xlane.xlu0 %1114
        %v1116 = vsel %vm1100, %v1112, 0.0
        %1117 = vadd.xlane.f32.xlu0 %v1116
        %v1118 = vpop.xlane.xlu0 %1117
        %v1119 = vpack.c.bf16 %v1112, %v1110
        %v1120 = vpack.c.bf16 %v965, %v960
        %v1122 = vsel %vm1100, %v1119, 0
        %1124 = vmatprep.subr.bf16.mxu0 0
        %1125 = vmatpush1.bf16.msra.mxu0 0
        %1126 = vmatprep.subr.bf16.mxu0 0
        %1127 = vmatpush1.bf16.msra.mxu0 0
        %1128 = vmatprep.subr.bf16.mxu0 0
        %1129 = vmatpush1.bf16.msra.mxu0 0
        %1130 = vmatprep.subr.bf16.mxu0 0
        %1131 = vmatpush1.bf16.msra.mxu0 0
        %1132 = vmatprep.subr.bf16.mxu0 0
        %1133 = vmatpush1.bf16.msra.mxu0 0
        %1134 = vmatprep.subr.bf16.mxu0 0
        %1135 = vmatpush1.bf16.msra.mxu0 0
        %1136 = vmatprep.subr.bf16.mxu0 0
        %1137 = vmatpush1.bf16.msra.mxu0 0
        %1138 = vmatprep.subr.bf16.mxu0 0
        %1139 = vmatpush1.bf16.msra.mxu0 %v1120
        %1140 = vmatprep.subr.bf16.mxu0 0
        %1141 = vmatpush2.bf16.msra.mxu0 0
        %1142 = vmatprep.subr.bf16.mxu0 0
        %1143 = vmatpush2.bf16.msra.mxu0 0
        %1144 = vmatprep.subr.bf16.mxu0 0
        %1145 = vmatpush2.bf16.msra.mxu0 0
        %1146 = vmatprep.subr.bf16.mxu0 0
        %1147 = vmatpush2.bf16.msra.mxu0 0
        %1148 = vmatprep.subr.bf16.mxu0 0
        %1149 = vmatpush2.bf16.msra.mxu0 0
        %1150 = vmatprep.subr.bf16.mxu0 0
        %1151 = vmatpush2.bf16.msra.mxu0 0
        %1152 = vmatprep.subr.bf16.mxu0 0
        %1153 = vmatpush2.bf16.msra.mxu0 0
        %1154 = vmatprep.subr.bf16.mxu0 0
        %1155 = vmatpush2.bf16.msra.mxu0 0
        %1156 = vmatprep.mubr.bf16.mxu0 0
        %1157 = vmatmul.mubr.bf16.gmra.mxu0 %v1122
        %v1158 = vpop.f32.mrf.mxu0
        %v1159 = vadd.f32 0.0, %v1158
        %v1160 = vpop.f32.mrf.mxu0
        %v1161 = vpop.f32.mrf.mxu0
        %v1162 = vadd.f32 0.0, %v1161
        %v1163 = vpop.f32.mrf.mxu0
        %1164 = vdwg.mxu0
        %v1165 = vrcp.pop %v1115
        %v1166 = vrcp.pop %v1118
        %v1167 = vmul.f32 %v1159, %v1165
        %v1168 = vmul.f32 %v1162, %v1166
        %v1170 = vlaneseq
        %v1171 = vshrl.u32 %v1170, 7
        %v1172 = vsub.s32 0, %v1171
        %v1173 = vrot.slane %v881, %v1172
        %v1175 = vadd.f32 %v1167, %v1173
        %v1176 = vadd.f32 %v1168, %v1173
        %v1177 = vmax.f32 %v1175, 0.0
        %v1178 = vmax.f32 %v1176, 0.0
        %v1179 = vld [vmem:[#allocation3] sm:$0xff]
        %v1180 = vld [vmem:[#allocation3 + $0x8] sm:$0xff]
        %v1181 = vld [vmem:[%s563] sm:$0x7]
        %v1183 = vsel %vm882, %v1177, 0
        %v1186 = vsel %vm882, %v1178, 0
        %v1189 = vsel %vm889, %v1181, 0
        %1191 = vmatprep.subr.mxu0 0.0
        %1192 = vmatpush1.msra.mxu0 0.0
        %1193 = vmatprep.subr.mxu0 0.0
        %1194 = vmatpush1.msra.mxu0 0.0
        %1195 = vmatprep.subr.mxu0 0.0
        %1196 = vmatpush1.msra.mxu0 0.0
        %1197 = vmatprep.subr.mxu0 0.0
        %1198 = vmatpush1.msra.mxu0 0.0
        %1199 = vmatprep.subr.mxu0 0.0
        %1200 = vmatpush1.msra.mxu0 0.0
        %1201 = vmatprep.subr.mxu0 0.0
        %1202 = vmatpush1.msra.mxu0 0.0
        %1203 = vmatprep.subr.mxu0 0.0
        %1204 = vmatpush1.msra.mxu0 0.0
        %1205 = vmatprep.subr.mxu0 0.0
        %1206 = vmatpush1.msra.mxu0 0.0
        %1207 = vmatprep.subr.mxu0 0.0
        %1208 = vmatpush1.msra.mxu0 0.0
        %1209 = vmatprep.subr.mxu0 0.0
        %1210 = vmatpush1.msra.mxu0 0.0
        %1211 = vmatprep.subr.mxu0 0.0
        %1212 = vmatpush1.msra.mxu0 0.0
        %1213 = vmatprep.subr.mxu0 0.0
        %1214 = vmatpush1.msra.mxu0 0.0
        %1215 = vmatprep.subr.mxu0 0.0
        %1216 = vmatpush1.msra.mxu0 0.0
        %1217 = vmatprep.subr.mxu0 0.0
        %1218 = vmatpush1.msra.mxu0 0.0
        %1219 = vmatprep.subr.mxu0 0.0
        %1220 = vmatpush1.msra.mxu0 0.0
        %1221 = vmatprep.subr.mxu0 0.0
        %1222 = vmatpush1.msra.mxu0 %v1189
        %1223 = vmatprep.subr.mxu0 0.0
        %1224 = vmatpush2.msra.mxu0 0.0
        %1225 = vmatprep.subr.mxu0 0.0
        %1226 = vmatpush2.msra.mxu0 0.0
        %1227 = vmatprep.subr.mxu0 0.0
        %1228 = vmatpush2.msra.mxu0 0.0
        %1229 = vmatprep.subr.mxu0 0.0
        %1230 = vmatpush2.msra.mxu0 0.0
        %1231 = vmatprep.subr.mxu0 0.0
        %1232 = vmatpush2.msra.mxu0 0.0
        %1233 = vmatprep.subr.mxu0 0.0
        %1234 = vmatpush2.msra.mxu0 0.0
        %1235 = vmatprep.subr.mxu0 0.0
        %1236 = vmatpush2.msra.mxu0 0.0
        %1237 = vmatprep.subr.mxu0 0.0
        %1238 = vmatpush2.msra.mxu0 0.0
        %1239 = vmatprep.subr.mxu0 0.0
        %1240 = vmatpush2.msra.mxu0 0.0
        %1241 = vmatprep.subr.mxu0 0.0
        %1242 = vmatpush2.msra.mxu0 0.0
        %1243 = vmatprep.subr.mxu0 0.0
        %1244 = vmatpush2.msra.mxu0 0.0
        %1245 = vmatprep.subr.mxu0 0.0
        %1246 = vmatpush2.msra.mxu0 0.0
        %1247 = vmatprep.subr.mxu0 0.0
        %1248 = vmatpush2.msra.mxu0 0.0
        %1249 = vmatprep.subr.mxu0 0.0
        %1250 = vmatpush2.msra.mxu0 0.0
        %1251 = vmatprep.subr.mxu0 0.0
        %1252 = vmatpush2.msra.mxu0 0.0
        %1253 = vmatprep.subr.mxu0 0.0
        %1254 = vmatpush2.msra.mxu0 0.0
        %1255 = vmatprep.mubr.f32.mxu0 0.0
        %1256 = vmatmul.mubr.f32.gmra.mxu0 %v1183
        %v1257 = vpop.f32.mrf.mxu0
        %v1258 = vadd.f32 0.0, %v1257
        %v1259 = vpop.f32.mrf.mxu0
        %1260 = vmatprep.mubr.f32.mxu0 0.0
        %1261 = vmatmul.mubr.f32.gmra.mxu0 %v1186
        %v1262 = vpop.f32.mrf.mxu0
        %v1263 = vadd.f32 0.0, %v1262
        %v1264 = vpop.f32.mrf.mxu0
        %1265 = vdwg.mxu0
        %v1266 = vadd.f32 %v1179, %v1258
        %v1267 = vadd.f32 %v1180, %v1263
        %1268 = vst [vmem:[#allocation3] sm:$0xff] %v1266
        %1269 = vst [vmem:[#allocation3 + $0x8] sm:$0xff] %v1267
        %p1270 = scmp.eq.s32.totalorder %s29, 3
        // Predicated region
        $region101: #{tpu_custom_call.1} parent=75 // pred_check
          %p1271 = pneg %p1270
        $region102: #{tpu_custom_call.1} parent=75 // pred_check_branch
          %1273 = sbr.rel (%p1271) target = $region104
        $region103: #{tpu_custom_call.1} parent=75 // pred_region
          %v1274 = vld [vmem:[#allocation3] sm:$0xff]
          %v1275 = vld [vmem:[#allocation3 + $0x8] sm:$0xff]
          %v1276 = vld [vmem:[#allocation9] sm:$0x1]
          %v1278 = vlaneseq
          %v1279 = vshrl.u32 %v1278, 7
          %v1280 = vsub.s32 0, %v1279
          %v1281 = vrot.slane %v1276, %v1280
          %v1283 = vadd.f32 %v1274, %v1281
          %v1284 = vadd.f32 %v1275, %v1281
          %v1285 = vmax.f32 %v1283, 0.0
          %v1286 = vmax.f32 %v1284, 0.0
          %v1287 = vadd.f32 %v1285, %v1286
          %v1288 = vrot.slane %v1287, 4
          %v1289 = vadd.f32 %v1287, %v1288
          %v1290 = vrot.slane %v1289, 2
          %v1291 = vadd.f32 %v1289, %v1290
          %v1292 = vrot.slane %v1291, 1
          %v1293 = vadd.f32 %v1291, %v1292
          %v1294 = vrcp.pop 16.0
          %v1295 = vmul.f32 %v1293, %v1294
          %v1296 = vsub.f32 %v1285, %v1295
          %v1297 = vsub.f32 %v1286, %v1295
          %v1298 = vmul.f32 %v1296, %v1296
          %v1299 = vmul.f32 %v1297, %v1297
          %v1300 = vadd.f32 %v1298, %v1299
          %v1301 = vrot.slane %v1300, 4
          %v1302 = vadd.f32 %v1300, %v1301
          %v1303 = vrot.slane %v1302, 2
          %v1304 = vadd.f32 %v1302, %v1303
          %v1305 = vrot.slane %v1304, 1
          %v1306 = vadd.f32 %v1304, %v1305
          %v1307 = vmul.f32 %v1306, %v1294
          %v1308 = vadd.f32 %v1307, 1e-05
          %v1309 = vrsqrt.pop %v1308
          %v1310 = vmul.f32 %v1296, %v1309
          %v1311 = vmul.f32 %v1297, %v1309
          %v1312 = vld [vmem:[#allocation10] sm:$0x1]
          %v1314 = vlaneseq
          %v1315 = vshrl.u32 %v1314, 7
          %v1316 = vsub.s32 0, %v1315
          %v1317 = vrot.slane %v1312, %v1316
          %v1319 = vmul.f32 %v1310, %v1317
          %v1320 = vmul.f32 %v1311, %v1317
          %v1321 = vld [vmem:[#allocation12] sm:$0x1]
          %v1323 = vlaneseq
          %v1324 = vshrl.u32 %v1323, 7
          %v1325 = vsub.s32 0, %v1324
          %v1326 = vrot.slane %v1321, %v1325
          %v1328 = vadd.f32 %v1319, %v1326
          %v1329 = vadd.f32 %v1320, %v1326
          %v1330 = vld [vmem:[%s12] sm:$0xff]
          %v1331 = vld [vmem:[%s12 + $0x8] sm:$0xff]
          %v1332 = vld [vmem:[%s12 + $0x10] sm:$0xff]
          %v1333 = vld [vmem:[%s12 + $0x18] sm:$0xff]
          %v1334 = vld [vmem:[%s12 + $0x20] sm:$0xff]
          %v1335 = vld [vmem:[%s12 + $0x28] sm:$0xff]
          %v1336 = vld [vmem:[%s12 + $0x30] sm:$0xff]
          %v1337 = vld [vmem:[%s12 + $0x38] sm:$0xff]
          %v1338 = vld [vmem:[%s12 + $0x40] sm:$0xff]
          %v1339 = vld [vmem:[%s12 + $0x48] sm:$0xff]
          %v1340 = vld [vmem:[%s12 + $0x50] sm:$0xff]
          %v1341 = vld [vmem:[%s12 + $0x58] sm:$0xff]
          %v1342 = vld [vmem:[%s12 + $0x60] sm:$0xff]
          %v1343 = vld [vmem:[%s12 + $0x68] sm:$0xff]
          %v1344 = vld [vmem:[%s12 + $0x70] sm:$0xff]
          %v1345 = vld [vmem:[%s12 + $0x78] sm:$0xff]
          %v1346 = vld [vmem:[%s13] sm:$0x1]
          %v1348 = vlaneseq
          %v1349 = vshrl.u32 %v1348, 7
          %v1350 = vsub.s32 0, %v1349
          %v1351 = vrot.slane %v1346, %v1350
          %1353 = vmatprep.subr.mxu0 0.0
          %1354 = vmatpush1.msra.mxu0 %v1345
          %1355 = vmatprep.subr.mxu0 0.0
          %1356 = vmatpush1.msra.mxu0 %v1344
          %1357 = vmatprep.subr.mxu0 0.0
          %1358 = vmatpush1.msra.mxu0 %v1343
          %1359 = vmatprep.subr.mxu0 0.0
          %1360 = vmatpush1.msra.mxu0 %v1342
          %1361 = vmatprep.subr.mxu0 0.0
          %1362 = vmatpush1.msra.mxu0 %v1341
          %1363 = vmatprep.subr.mxu0 0.0
          %1364 = vmatpush1.msra.mxu0 %v1340
          %1365 = vmatprep.subr.mxu0 0.0
          %1366 = vmatpush1.msra.mxu0 %v1339
          %1367 = vmatprep.subr.mxu0 0.0
          %1368 = vmatpush1.msra.mxu0 %v1338
          %1369 = vmatprep.subr.mxu0 0.0
          %1370 = vmatpush1.msra.mxu0 %v1337
          %1371 = vmatprep.subr.mxu0 0.0
          %1372 = vmatpush1.msra.mxu0 %v1336
          %1373 = vmatprep.subr.mxu0 0.0
          %1374 = vmatpush1.msra.mxu0 %v1335
          %1375 = vmatprep.subr.mxu0 0.0
          %1376 = vmatpush1.msra.mxu0 %v1334
          %1377 = vmatprep.subr.mxu0 0.0
          %1378 = vmatpush1.msra.mxu0 %v1333
          %1379 = vmatprep.subr.mxu0 0.0
          %1380 = vmatpush1.msra.mxu0 %v1332
          %1381 = vmatprep.subr.mxu0 0.0
          %1382 = vmatpush1.msra.mxu0 %v1331
          %1383 = vmatprep.subr.mxu0 0.0
          %1384 = vmatpush1.msra.mxu0 %v1330
          %1385 = vmatprep.subr.mxu0 0.0
          %1386 = vmatpush2.msra.mxu0 0.0
          %1387 = vmatprep.subr.mxu0 0.0
          %1388 = vmatpush2.msra.mxu0 0.0
          %1389 = vmatprep.subr.mxu0 0.0
          %1390 = vmatpush2.msra.mxu0 0.0
          %1391 = vmatprep.subr.mxu0 0.0
          %1392 = vmatpush2.msra.mxu0 0.0
          %1393 = vmatprep.subr.mxu0 0.0
          %1394 = vmatpush2.msra.mxu0 0.0
          %1395 = vmatprep.subr.mxu0 0.0
          %1396 = vmatpush2.msra.mxu0 0.0
          %1397 = vmatprep.subr.mxu0 0.0
          %1398 = vmatpush2.msra.mxu0 0.0
          %1399 = vmatprep.subr.mxu0 0.0
          %1400 = vmatpush2.msra.mxu0 0.0
          %1401 = vmatprep.subr.mxu0 0.0
          %1402 = vmatpush2.msra.mxu0 0.0
          %1403 = vmatprep.subr.mxu0 0.0
          %1404 = vmatpush2.msra.mxu0 0.0
          %1405 = vmatprep.subr.mxu0 0.0
          %1406 = vmatpush2.msra.mxu0 0.0
          %1407 = vmatprep.subr.mxu0 0.0
          %1408 = vmatpush2.msra.mxu0 0.0
          %1409 = vmatprep.subr.mxu0 0.0
          %1410 = vmatpush2.msra.mxu0 0.0
          %1411 = vmatprep.subr.mxu0 0.0
          %1412 = vmatpush2.msra.mxu0 0.0
          %1413 = vmatprep.subr.mxu0 0.0
          %1414 = vmatpush2.msra.mxu0 0.0
          %1415 = vmatprep.subr.mxu0 0.0
          %1416 = vmatpush2.msra.mxu0 0.0
          %1417 = vmatprep.mubr.f32.mxu0 0.0
          %1418 = vmatmul.mubr.f32.gmra.mxu0 %v1328
          %v1419 = vpop.f32.mrf.mxu0
          %v1420 = vadd.f32 %v1351, %v1419
          %v1421 = vpop.f32.mrf.mxu0
          %1422 = vmatprep.mubr.f32.mxu0 0.0
          %1423 = vmatmul.mubr.f32.gmra.mxu0 %v1329
          %v1424 = vpop.f32.mrf.mxu0
          %v1425 = vadd.f32 %v1351, %v1424
          %v1426 = vpop.f32.mrf.mxu0
          %1427 = vdwg.mxu0
          %v1428 = vxor.u32 %v1420, 2147483648
          %v1429 = vxor.u32 %v1425, 2147483648
          %v1430 = vmul.f32 %v1428, 1.442695
          %v1431 = vpow.pop %v1430
          %v1432 = vmul.f32 %v1429, 1.442695
          %v1433 = vpow.pop %v1432
          %v1434 = vadd.f32 %v1431, 1.0
          %v1435 = vadd.f32 %v1433, 1.0
          %v1436 = vrcp.pop %v1434
          %v1437 = vmul.f32 1.0, %v1436
          %v1438 = vrcp.pop %v1435
          %v1439 = vmul.f32 1.0, %v1438
          %1440 = vst [vmem:[#allocation13] sm:$0xff] %v1437
          %1441 = vst [vmem:[#allocation13 + $0x8] sm:$0xff] %v1439
        $region104: #{tpu_custom_call.1} parent=75 // pred_fallthru
          _
        // Predicated region
        $region105: #{tpu_custom_call.1} parent=75 // pred_check
          %p1442 = pneg %p356
        $region106: #{tpu_custom_call.1} parent=75 // pred_check_branch
          %1444 = sbr.rel (%p1442) target = $region108
        $region107: #{tpu_custom_call.1} parent=75 // pred_region
          %s1446 = ssub.s32 256, 256
          %1447 = vsyncadd [#allocation6], %s1446
          %s1448 = sshll.u32 [#allocation13], 4
          %s1449 = int_to_ptr.vmem [resolvable:$true] %s1448
          %1454 = dma.vmem_to_hbm [thread:$0]  %s1449, 256, %s14, [#allocation6], 128, 128, 8
        $region108: #{tpu_custom_call.1} parent=75 // pred_fallthru
          _
        // Predicated region
        $region109: #{tpu_custom_call.1} parent=75 // pred_check
          %p1455 = pneg %p356
        $region110: #{tpu_custom_call.1} parent=75 // pred_check_branch
          %1457 = sbr.rel (%p1455) target = $region112
        $region111: #{tpu_custom_call.1} parent=75 // pred_region
          %1458 = dma.done [#allocation6], 256
        $region112: #{tpu_custom_call.1} parent=75 // pred_fallthru
          _
      $region76: #{tpu_custom_call.1} parent=5 // pred_fallthru
        _
      %p1459 = scmp.le.s32.totalorder 2, %s24
      // Predicated region
      $region113: #{tpu_custom_call.1} parent=5 // pred_check
        %p1460 = pneg %p1459
      $region114: #{tpu_custom_call.1} parent=5 // pred_check_branch
        %1462 = sbr.rel (%p1460) target = $region116
      $region115: #{tpu_custom_call.1} parent=5 // pred_region
        %s1463 = ssub.s32 %s24, 2
      $region116: #{tpu_custom_call.1} parent=5 // pred_fallthru
        _
    $region6: #{tpu_custom_call.1} parent=1 // loop_footer
      %s28 = sadd.s32 1, %s24
    $region7: #{tpu_custom_call.1} parent=1 // loop_footer_branch
      %23 = sbr.rel target = $region3
    $region8: #{tpu_custom_call.1} parent=1 // loop_exit
      _
    %1464 = vsyncpa [#allocation5], 1
    %s1465 = scalar_lea.sflag [#allocation5], 1
    %1466 = vsyncpa %s1465, 1
    %1467 = vsyncpa [#allocation8], 1
    %1468 = vsyncpa [#allocation11], 1
    %1469 = vsyncpa [#allocation6], 1
    %s1470 = scalar_lea.sflag [#allocation6], 1
    %1471 = vsyncpa %s1470, 1

</llo_original>
